<compile_context>
chip_gen: v6e
topology: v6e:2x2x1
jax: 0.10.0
libtpu: 0.0.40
codegen_flags: <defaults>
</compile_context>

<pallas_src>
import functools
import math

import jax
import jax.numpy as jnp
from jax import lax
from jax.experimental import pallas as pl
from jax.experimental.pallas import tpu as pltpu


# ----------------------------------------------------------------------------
# Fused kernel: conv3x3 (im2col, single MXU matmul) + folded BN affine + ReLU.
# ----------------------------------------------------------------------------
def _fused_conv_bn_relu_kernel(x_ref, w_ref, scale_ref, shift_ref, o_ref,
                               xp_ref, p_ref, *, K, H, W):
    # x_ref     : (1, H, W, Cin)       channels-last input block (one batch elem)
    # w_ref     : (Cout, K*K*Cin) bf16 weight matrix, column = (kh*K+kw)*Cin+ci
    # scale_ref : (Cout, 1) f32        gamma * rsqrt(var + eps)
    # shift_ref : (Cout, 1) f32        (bias - mean) * scale + beta
    # o_ref     : (1, Cout, H*W)       NCHW-layout, lane-dense output
    # xp_ref    : (H+2, W+2, Cin) f32  VMEM scratch: zero-padded input
    # p_ref     : (H*W, K*K*Cin) bf16  VMEM scratch: im2col patch matrix
    Cin = x_ref.shape[-1]
    HW = H * W

    # --- in-kernel zero padding (padding=1) -------------------------------
    xp_ref[...] = jnp.zeros_like(xp_ref)
    xp_ref[1:1 + H, 1:1 + W, :] = x_ref[0]

    # --- build the im2col patch matrix once in VMEM (bf16) ----------------
    # (H,W)->(H*W) merges the two MAJOR dims of a channels-last slice, which
    # is a free relabeling (no lane/sublane data movement).
    for kh in range(K):
        for kw in range(K):
            t = kh * K + kw
            p_ref[:, t * Cin:(t + 1) * Cin] = (
                xp_ref[kh:kh + H, kw:kw + W, :]
                .reshape(HW, Cin).astype(p_ref.dtype))

    # --- single MXU matmul, lane-dense (Cout, H*W) result -----------------
    # Contract the K*K*Cin axis of both operands (A @ B^T form, MXU consumes
    # the RHS transposed) so the output last dim is H*W (full 128-lane
    # unmasked stores).  bf16 inputs, fp32 accumulate.
    acc = lax.dot_general(
        w_ref[...], p_ref[...],
        dimension_numbers=(((1,), (1,)), ((), ())),
        preferred_element_type=jnp.float32)                      # (Cout, HW)

    # --- folded conv-bias + eval-BN affine, then ReLU, all fp32 -----------
    y = jnp.maximum(acc * scale_ref[...] + shift_ref[...], 0.0)

    o_ref[...] = y[None].astype(o_ref.dtype)


# ----------------------------------------------------------------------------
# Wrapper: PyTorch-style NCHW in, NCHW out.
# ----------------------------------------------------------------------------
def gaussian_layer_block_forward(x_nchw, params, *, eps=1e-5,
                                 matmul_dtype=jnp.bfloat16):
    N, Cin, H, W = x_nchw.shape
    K = 3
    w_oihw = params["weight"]                    # (Cout, Cin, K, K)
    Cout = w_oihw.shape[0]
    KKC = K * K * Cin

    # (Cout,Cin,K,K) -> (Cout,K,K,Cin) -> (Cout, K*K*Cin); columns match the
    # in-kernel patch layout.  Stored bf16 for the MXU.
    w_mat = jnp.transpose(w_oihw, (0, 2, 3, 1)).reshape(Cout, KKC)
    w_mat = w_mat.astype(matmul_dtype)

    # Fold conv bias + eval-mode BatchNorm into one per-channel affine
    # (computed once here instead of once per grid step in the kernel).
    col = lambda v: v.reshape(Cout, 1).astype(jnp.float32)
    scale = col(params["gamma"]) * lax.rsqrt(col(params["running_var"]) + eps)
    shift = (col(params["bias"]) - col(params["running_mean"])) * scale \
        + col(params["beta"])

    # One cheap transpose on the way in (channels-last patches => free
    # in-kernel reshapes); the output comes back already in NCHW layout.
    x_nhwc = jnp.transpose(x_nchw, (0, 2, 3, 1))

    kern = functools.partial(_fused_conv_bn_relu_kernel, K=K, H=H, W=W)
    const2 = lambda n: (0, 0)                    # weights / affine stay resident

    out = pl.pallas_call(
        kern,
        out_shape=jax.ShapeDtypeStruct((N, Cout, H * W), jnp.float32),
        grid=(N,),
        in_specs=[
            pl.BlockSpec((1, H, W, Cin), lambda n: (n, 0, 0, 0)),
            pl.BlockSpec((Cout, KKC), const2),   # weight matrix
            pl.BlockSpec((Cout, 1), const2),     # folded BN scale
            pl.BlockSpec((Cout, 1), const2),     # folded BN shift
        ],
        out_specs=pl.BlockSpec((1, Cout, H * W), lambda n: (n, 0, 0)),
        scratch_shapes=[
            pltpu.VMEM((H + 2, W + 2, Cin), jnp.float32),   # padded input
            pltpu.VMEM((H * W, KKC), matmul_dtype),         # im2col patches
        ],
        compiler_params=pltpu.CompilerParams(dimension_semantics=("parallel",)),
    )(x_nhwc, w_mat, scale, shift)

    # (N, Cout, H*W) is already NCHW layout: reshape only, no transpose.
    return out.reshape(N, Cout, H, W)


# ----------------------------------------------------------------------------
# Parameter init matching the PyTorch module's __init__.
# ----------------------------------------------------------------------------
def init_gaussian_layer_block(key, in_channels, out_channels):
    fan_in = in_channels * 3 * 3
    std = math.sqrt(2.0 / fan_in)                # kaiming_normal_, relu gain
    weight = std * jax.random.normal(
        key, (out_channels, in_channels, 3, 3), jnp.float32)
    return {
        "weight": weight,
        "bias": jnp.zeros((out_channels,), jnp.float32),        # constant_(0)
        "gamma": jnp.ones((out_channels,), jnp.float32),        # BN defaults
        "beta": jnp.zeros((out_channels,), jnp.float32),
        "running_mean": jnp.zeros((out_channels,), jnp.float32),
        "running_var": jnp.ones((out_channels,), jnp.float32),
    }


# ----------------------------------------------------------------------------
# Pure-JAX reference (lax.conv) with the same bf16-operand / fp32-accumulate
# numerics for a tight correctness cross-check.
# ----------------------------------------------------------------------------
def _reference_forward(x_nchw, params, *, eps=1e-5, matmul_dtype=jnp.bfloat16):
    x = x_nchw.astype(matmul_dtype)
    w = params["weight"].astype(matmul_dtype)
    y = lax.conv_general_dilated(
        x, w, window_strides=(1, 1), padding=((1, 1), (1, 1)),
        dimension_numbers=("NCHW", "OIHW", "NCHW"),
        preferred_element_type=jnp.float32)
    y = y + params["bias"][None, :, None, None]
    inv = params["gamma"] / jnp.sqrt(params["running_var"] + eps)
    y = ((y - params["running_mean"][None, :, None, None])
         * inv[None, :, None, None]
         + params["beta"][None, :, None, None])
    return jnp.maximum(y, 0.0)


if __name__ == "__main__":
    key = jax.random.PRNGKey(0)
    k_param, k_x, k_g, k_b, k_m, k_v = jax.random.split(key, 6)

    N, Cin, Cout, H, W = 2, 16, 8, 16, 16
    params = init_gaussian_layer_block(k_param, Cin, Cout)
    # Non-default BatchNorm statistics (as after training) so the BN path is
    # actually exercised by the numerical check.
    params["gamma"] = jax.random.uniform(k_g, (Cout,), jnp.float32, 0.5, 1.5)
    params["beta"] = 0.1 * jax.random.normal(k_b, (Cout,), jnp.float32)
    params["running_mean"] = 0.1 * jax.random.normal(k_m, (Cout,), jnp.float32)
    params["running_var"] = jax.random.uniform(k_v, (Cout,), jnp.float32, 0.5, 1.5)

    x = jax.random.normal(k_x, (N, Cin, H, W), jnp.float32)

    out = jax.block_until_ready(gaussian_layer_block_forward(x, params))
    ref = jax.block_until_ready(_reference_forward(x, params))

    assert out.shape == (N, Cout, H, W), out.shape
    max_err = float(jnp.max(jnp.abs(out - ref)))
    assert jnp.allclose(out, ref, atol=2e-3, rtol=2e-3), max_err

    print("KERNEL_OK")
</pallas_src>

<mosaic_0001>
module attributes {stable_mosaic.version = 11 : i64} {
  func.func @_fused_conv_bn_relu_kernel(%arg0: i32, %arg1: memref<1x16x16x16xf32, #tpu.memory_space<vmem>>, %arg2: memref<8x144xbf16, #tpu.memory_space<vmem>>, %arg3: memref<8x1xf32, #tpu.memory_space<vmem>>, %arg4: memref<8x1xf32, #tpu.memory_space<vmem>>, %arg5: memref<1x8x256xf32, #tpu.memory_space<vmem>>, %arg6: memref<18x18x16xf32, #tpu.memory_space<vmem>>, %arg7: memref<256x144xbf16, #tpu.memory_space<vmem>>) attributes {dimension_semantics = [#tpu.dimension_semantics<parallel>], iteration_bounds = array<i64: 2>, scalar_prefetch = 0 : i64, scratch_operands = 2 : i64, tpu.core_type = #tpu.core_type<tc>, window_params = [{transform_indices = @transform_0, window_bounds = array<i64: 1, 16, 16, 16>}, {pipeline_mode = #tpu.pipeline_mode<synchronous>, transform_indices = @transform_1, window_bounds = array<i64: 8, 144>}, {pipeline_mode = #tpu.pipeline_mode<synchronous>, transform_indices = @transform_2, window_bounds = array<i64: 8, 1>}, {pipeline_mode = #tpu.pipeline_mode<synchronous>, transform_indices = @transform_3, window_bounds = array<i64: 8, 1>}, {transform_indices = @transform_4, window_bounds = array<i64: 1, 8, 256>}]} {
    %cst = arith.constant 0.000000e+00 : f32
    %0 = vector.broadcast %cst : f32 to vector<18x18x16xf32>
    %c0 = arith.constant 0 : index
    %c0_0 = arith.constant 0 : index
    %c0_1 = arith.constant 0 : index
    %1 = vector.load %arg6[%c0, %c0_0, %c0_1] : memref<18x18x16xf32, #tpu.memory_space<vmem>>, vector<18x18x16xf32>
    tpu.vector_store %arg6[%c0, %c0_0, %c0_1], %0 {strides = array<i32>} : memref<18x18x16xf32, #tpu.memory_space<vmem>>, vector<18x18x16xf32>,
    %c0_2 = arith.constant 0 : index
    %c0_3 = arith.constant 0 : index
    %c0_4 = arith.constant 0 : index
    %c0_5 = arith.constant 0 : index
    %2 = vector.load %arg1[%c0_2, %c0_3, %c0_4, %c0_5] : memref<1x16x16x16xf32, #tpu.memory_space<vmem>>, vector<1x16x16x16xf32>
    %3 = vector.shape_cast %2 : vector<1x16x16x16xf32> to vector<16x16x16xf32>
    %c1 = arith.constant 1 : index
    %c1_6 = arith.constant 1 : index
    %c0_7 = arith.constant 0 : index
    %4 = vector.load %arg6[%c1, %c1_6, %c0_7] : memref<18x18x16xf32, #tpu.memory_space<vmem>>, vector<16x16x16xf32>
    tpu.vector_store %arg6[%c1, %c1_6, %c0_7], %3 {strides = array<i32>} : memref<18x18x16xf32, #tpu.memory_space<vmem>>, vector<16x16x16xf32>,
    %c0_8 = arith.constant 0 : index
    %c0_9 = arith.constant 0 : index
    %c0_10 = arith.constant 0 : index
    %5 = vector.load %arg6[%c0_8, %c0_9, %c0_10] : memref<18x18x16xf32, #tpu.memory_space<vmem>>, vector<16x16x16xf32>
    %6 = vector.shape_cast %5 : vector<16x16x16xf32> to vector<256x16xf32>
    %7 = arith.truncf %6 : vector<256x16xf32> to vector<256x16xbf16>
    %c0_11 = arith.constant 0 : index
    %c0_12 = arith.constant 0 : index
    %8 = vector.load %arg7[%c0_11, %c0_12] : memref<256x144xbf16, #tpu.memory_space<vmem>>, vector<256x16xbf16>
    tpu.vector_store %arg7[%c0_11, %c0_12], %7 {strides = array<i32>} : memref<256x144xbf16, #tpu.memory_space<vmem>>, vector<256x16xbf16>,
    %c0_13 = arith.constant 0 : index
    %c1_14 = arith.constant 1 : index
    %c0_15 = arith.constant 0 : index
    %9 = vector.load %arg6[%c0_13, %c1_14, %c0_15] : memref<18x18x16xf32, #tpu.memory_space<vmem>>, vector<16x16x16xf32>
    %10 = vector.shape_cast %9 : vector<16x16x16xf32> to vector<256x16xf32>
    %11 = arith.truncf %10 : vector<256x16xf32> to vector<256x16xbf16>
    %c0_16 = arith.constant 0 : index
    %c16 = arith.constant 16 : index
    %12 = vector.load %arg7[%c0_16, %c16] : memref<256x144xbf16, #tpu.memory_space<vmem>>, vector<256x16xbf16>
    tpu.vector_store %arg7[%c0_16, %c16], %11 {strides = array<i32>} : memref<256x144xbf16, #tpu.memory_space<vmem>>, vector<256x16xbf16>,
    %c0_17 = arith.constant 0 : index
    %c2 = arith.constant 2 : index
    %c0_18 = arith.constant 0 : index
    %13 = vector.load %arg6[%c0_17, %c2, %c0_18] : memref<18x18x16xf32, #tpu.memory_space<vmem>>, vector<16x16x16xf32>
    %14 = vector.shape_cast %13 : vector<16x16x16xf32> to vector<256x16xf32>
    %15 = arith.truncf %14 : vector<256x16xf32> to vector<256x16xbf16>
    %c0_19 = arith.constant 0 : index
    %c32 = arith.constant 32 : index
    %16 = vector.load %arg7[%c0_19, %c32] : memref<256x144xbf16, #tpu.memory_space<vmem>>, vector<256x16xbf16>
    tpu.vector_store %arg7[%c0_19, %c32], %15 {strides = array<i32>} : memref<256x144xbf16, #tpu.memory_space<vmem>>, vector<256x16xbf16>,
    %c1_20 = arith.constant 1 : index
    %c0_21 = arith.constant 0 : index
    %c0_22 = arith.constant 0 : index
    %17 = vector.load %arg6[%c1_20, %c0_21, %c0_22] : memref<18x18x16xf32, #tpu.memory_space<vmem>>, vector<16x16x16xf32>
    %18 = vector.shape_cast %17 : vector<16x16x16xf32> to vector<256x16xf32>
    %19 = arith.truncf %18 : vector<256x16xf32> to vector<256x16xbf16>
    %c0_23 = arith.constant 0 : index
    %c48 = arith.constant 48 : index
    %20 = vector.load %arg7[%c0_23, %c48] : memref<256x144xbf16, #tpu.memory_space<vmem>>, vector<256x16xbf16>
    tpu.vector_store %arg7[%c0_23, %c48], %19 {strides = array<i32>} : memref<256x144xbf16, #tpu.memory_space<vmem>>, vector<256x16xbf16>,
    %c1_24 = arith.constant 1 : index
    %c1_25 = arith.constant 1 : index
    %c0_26 = arith.constant 0 : index
    %21 = vector.load %arg6[%c1_24, %c1_25, %c0_26] : memref<18x18x16xf32, #tpu.memory_space<vmem>>, vector<16x16x16xf32>
    %22 = vector.shape_cast %21 : vector<16x16x16xf32> to vector<256x16xf32>
    %23 = arith.truncf %22 : vector<256x16xf32> to vector<256x16xbf16>
    %c0_27 = arith.constant 0 : index
    %c64 = arith.constant 64 : index
    %24 = vector.load %arg7[%c0_27, %c64] : memref<256x144xbf16, #tpu.memory_space<vmem>>, vector<256x16xbf16>
    tpu.vector_store %arg7[%c0_27, %c64], %23 {strides = array<i32>} : memref<256x144xbf16, #tpu.memory_space<vmem>>, vector<256x16xbf16>,
    %c1_28 = arith.constant 1 : index
    %c2_29 = arith.constant 2 : index
    %c0_30 = arith.constant 0 : index
    %25 = vector.load %arg6[%c1_28, %c2_29, %c0_30] : memref<18x18x16xf32, #tpu.memory_space<vmem>>, vector<16x16x16xf32>
    %26 = vector.shape_cast %25 : vector<16x16x16xf32> to vector<256x16xf32>
    %27 = arith.truncf %26 : vector<256x16xf32> to vector<256x16xbf16>
    %c0_31 = arith.constant 0 : index
    %c80 = arith.constant 80 : index
    %28 = vector.load %arg7[%c0_31, %c80] : memref<256x144xbf16, #tpu.memory_space<vmem>>, vector<256x16xbf16>
    tpu.vector_store %arg7[%c0_31, %c80], %27 {strides = array<i32>} : memref<256x144xbf16, #tpu.memory_space<vmem>>, vector<256x16xbf16>,
    %c2_32 = arith.constant 2 : index
    %c0_33 = arith.constant 0 : index
    %c0_34 = arith.constant 0 : index
    %29 = vector.load %arg6[%c2_32, %c0_33, %c0_34] : memref<18x18x16xf32, #tpu.memory_space<vmem>>, vector<16x16x16xf32>
    %30 = vector.shape_cast %29 : vector<16x16x16xf32> to vector<256x16xf32>
    %31 = arith.truncf %30 : vector<256x16xf32> to vector<256x16xbf16>
    %c0_35 = arith.constant 0 : index
    %c96 = arith.constant 96 : index
    %32 = vector.load %arg7[%c0_35, %c96] : memref<256x144xbf16, #tpu.memory_space<vmem>>, vector<256x16xbf16>
    tpu.vector_store %arg7[%c0_35, %c96], %31 {strides = array<i32>} : memref<256x144xbf16, #tpu.memory_space<vmem>>, vector<256x16xbf16>,
    %c2_36 = arith.constant 2 : index
    %c1_37 = arith.constant 1 : index
    %c0_38 = arith.constant 0 : index
    %33 = vector.load %arg6[%c2_36, %c1_37, %c0_38] : memref<18x18x16xf32, #tpu.memory_space<vmem>>, vector<16x16x16xf32>
    %34 = vector.shape_cast %33 : vector<16x16x16xf32> to vector<256x16xf32>
    %35 = arith.truncf %34 : vector<256x16xf32> to vector<256x16xbf16>
    %c0_39 = arith.constant 0 : index
    %c112 = arith.constant 112 : index
    %36 = vector.load %arg7[%c0_39, %c112] : memref<256x144xbf16, #tpu.memory_space<vmem>>, vector<256x16xbf16>
    tpu.vector_store %arg7[%c0_39, %c112], %35 {strides = array<i32>} : memref<256x144xbf16, #tpu.memory_space<vmem>>, vector<256x16xbf16>,
    %c2_40 = arith.constant 2 : index
    %c2_41 = arith.constant 2 : index
    %c0_42 = arith.constant 0 : index
    %37 = vector.load %arg6[%c2_40, %c2_41, %c0_42] : memref<18x18x16xf32, #tpu.memory_space<vmem>>, vector<16x16x16xf32>
    %38 = vector.shape_cast %37 : vector<16x16x16xf32> to vector<256x16xf32>
    %39 = arith.truncf %38 : vector<256x16xf32> to vector<256x16xbf16>
    %c0_43 = arith.constant 0 : index
    %c128 = arith.constant 128 : index
    %40 = vector.load %arg7[%c0_43, %c128] : memref<256x144xbf16, #tpu.memory_space<vmem>>, vector<256x16xbf16>
    tpu.vector_store %arg7[%c0_43, %c128], %39 {strides = array<i32>} : memref<256x144xbf16, #tpu.memory_space<vmem>>, vector<256x16xbf16>,
    %c0_44 = arith.constant 0 : index
    %c0_45 = arith.constant 0 : index
    %41 = vector.load %arg2[%c0_44, %c0_45] : memref<8x144xbf16, #tpu.memory_space<vmem>>, vector<8x144xbf16>
    %c0_46 = arith.constant 0 : index
    %c0_47 = arith.constant 0 : index
    %42 = vector.load %arg7[%c0_46, %c0_47] : memref<256x144xbf16, #tpu.memory_space<vmem>>, vector<256x144xbf16>
    %cst_48 = arith.constant dense<0.000000e+00> : vector<8x256xf32>
    %43 = tpu.matmul %41, %42, %cst_48 {dimension_numbers = #tpu.dot_dimension_numbers<[1], [1], [0], [0], [0, 0, 1, 0], [], []>} : vector<8x144xbf16>, vector<256x144xbf16>, vector<8x256xf32> -> vector<8x256xf32>
    %c0_49 = arith.constant 0 : index
    %c0_50 = arith.constant 0 : index
    %44 = vector.load %arg3[%c0_49, %c0_50] : memref<8x1xf32, #tpu.memory_space<vmem>>, vector<8x1xf32>
    %45 = vector.broadcast %44 : vector<8x1xf32> to vector<8x256xf32>
    %46 = arith.mulf %43, %45 : vector<8x256xf32>
    %c0_51 = arith.constant 0 : index
    %c0_52 = arith.constant 0 : index
    %47 = vector.load %arg4[%c0_51, %c0_52] : memref<8x1xf32, #tpu.memory_space<vmem>>, vector<8x1xf32>
    %48 = vector.broadcast %47 : vector<8x1xf32> to vector<8x256xf32>
    %49 = arith.addf %46, %48 : vector<8x256xf32>
    %cst_53 = arith.constant 0.000000e+00 : f32
    %50 = vector.broadcast %cst_53 : f32 to vector<8x256xf32>
    %51 = arith.maximumf %49, %50 : vector<8x256xf32>
    %52 = vector.shape_cast %51 : vector<8x256xf32> to vector<1x8x256xf32>
    %c0_54 = arith.constant 0 : index
    %c0_55 = arith.constant 0 : index
    %c0_56 = arith.constant 0 : index
    %53 = vector.load %arg5[%c0_54, %c0_55, %c0_56] : memref<1x8x256xf32, #tpu.memory_space<vmem>>, vector<1x8x256xf32>
    tpu.vector_store %arg5[%c0_54, %c0_55, %c0_56], %52 {strides = array<i32>} : memref<1x8x256xf32, #tpu.memory_space<vmem>>, vector<1x8x256xf32>,
    return
  }
  func.func @transform_0(%arg0: i32) -> (i32, i32, i32, i32) {
    %c0_i32 = arith.constant 0 : i32
    %c0_i32_0 = arith.constant 0 : i32
    %c0_i32_1 = arith.constant 0 : i32
    %c0_i32_2 = arith.constant 0 : i32
    return %arg0, %c0_i32, %c0_i32_0, %c0_i32_1 : i32, i32, i32, i32
  }
  func.func @transform_1(%arg0: i32) -> (i32, i32) {
    %c0_i32 = arith.constant 0 : i32
    %c0_i32_0 = arith.constant 0 : i32
    %c0_i32_1 = arith.constant 0 : i32
    return %c0_i32, %c0_i32_0 : i32, i32
  }
  func.func @transform_2(%arg0: i32) -> (i32, i32) {
    %c0_i32 = arith.constant 0 : i32
    %c0_i32_0 = arith.constant 0 : i32
    %c0_i32_1 = arith.constant 0 : i32
    return %c0_i32, %c0_i32_0 : i32, i32
  }
  func.func @transform_3(%arg0: i32) -> (i32, i32) {
    %c0_i32 = arith.constant 0 : i32
    %c0_i32_0 = arith.constant 0 : i32
    %c0_i32_1 = arith.constant 0 : i32
    return %c0_i32, %c0_i32_0 : i32, i32
  }
  func.func @transform_4(%arg0: i32) -> (i32, i32, i32) {
    %c0_i32 = arith.constant 0 : i32
    %c0_i32_0 = arith.constant 0 : i32
    %c0_i32_1 = arith.constant 0 : i32
    return %arg0, %c0_i32, %c0_i32_0 : i32, i32, i32
  }
}

</mosaic_0001>

<llo_original>
// kernel: tpu_custom_call.1
$region0: #{tpu_custom_call.1}
  #allocation0 [shape = 'u32[]', space=smem, size = 0x4, offset = 0x4, fixed_abs, tag = 'smem constant byte address 0x4 - core index']
  #allocation1 [shape = 'u32[144,128]{1,0:T(1,128)}', space=vmem, size = 0x12000, scoped, tag = 'internal scratch']
  #allocation2 [shape = 'f32[18,18,16]{2,1,0:T(8,128)}', space=vmem, size = 0x36000, scoped, tag = 'scratch operand']
  #allocation3 [shape = 'bf16[256,144]{1,0:T(8,128)(2,1)}', space=vmem, size = 0x20000, scoped, tag = 'scratch operand']
  %s0 = inlined_call_operand.hbm [shape: f32[2,16,16,16], index: 0, kind: input, shape index: {}]
  %s1 = inlined_call_operand.vmem [shape: bf16[8,144], index: 1, kind: input, shape index: {}]
  %s2 = inlined_call_operand.vmem [shape: f32[8,1], index: 2, kind: input, shape index: {}]
  %s3 = inlined_call_operand.vmem [shape: f32[8,1], index: 3, kind: input, shape index: {}]
  %s4 = inlined_call_operand.hbm [shape: f32[2,8,256], index: 4, kind: output, shape index: {}]
  %s5 = sld [smem:[#allocation0]]
  $region53: #{tpu_custom_call.1} parent=0
    _
  %s7 = ssub.s32 1, %s5
  %s8 = scalar_select 0, %s7, %s5
  $region1: #{tpu_custom_call.1} parent=0
    #allocation4 [shape = 'u8[262144]{0}', space=vmem, size = 0x40000, scoped, tag = 'input window, operand 0']
    #allocation5 [shape = 's32[2]{0}', space=sflag, size = 0x8, scoped, tag = 'scoped memory for tpu_custom_call.1']
    #allocation6 [shape = 's32[2]{0}', space=sflag, size = 0x8, scoped, tag = 'scoped memory for tpu_custom_call.1']
    #allocation7 [shape = 'u8[16384]{0}', space=vmem, size = 0x4000, scoped, tag = 'output window, operand 0']
    %9 = vsyncpa [#allocation5], 0
    %s10 = scalar_lea.sflag [#allocation5], 1
    %11 = vsyncpa %s10, 0
    %12 = vsyncpa [#allocation6], 0
    %s13 = scalar_lea.sflag [#allocation6], 1
    %14 = vsyncpa %s13, 0
    loop: start=0, step=1, limit=4
    $region2: #{tpu_custom_call.1} parent=1 // loop_pre_header
      _
    $region3: #{tpu_custom_call.1} parent=1 // loop_header
      %s16 = sphi 0, %s20
      %p17 = scmp.ge.s32.totalorder %s16, 4
      %s26 = sphi 0, %s28
      %s29 = sphi 0, %s26
      %s30 = sphi 0, %s29
      %s46 = sphi 0, %s30
      %s50 = sphi 0, %s50
      %s52 = sphi 0, %s50
      %s53 = sphi 0, %s52
      %s67 = sphi 0, %s53
      %s71 = sphi 0, %s71
      %s73 = sphi 0, %s71
      %s74 = sphi 0, %s73
      %s88 = sphi 0, %s74
      %s92 = sphi 0, %s92
      %s94 = sphi 0, %s92
      %s95 = sphi 0, %s94
      %s109 = sphi 0, %s95
      %s115 = sphi 0, %s117
      %s118 = sphi 0, %s115
      %s119 = sphi 0, %s118
      %s135 = sphi 0, %s119
    $region4: #{tpu_custom_call.1} parent=1 // loop_header_branch
      %19 = sbr.rel (%p17) target = $region8
    $region5: #{tpu_custom_call.1} parent=1 // loop_body
      %s21 = ssub.s32 %s16, 1
      %s22 = ssub.s32 %s16, 2
      %s23 = sadd.s32 %s16, 1
      %s24 = ssub.s32 %s16, %s23
      %p25 = scmp.eq.s32.totalorder %s24, 0
      %s27 = sadd.s32 %s26, 1
      %s28 = scalar_select %p25, %s26, %s27
      %p31 = pneg %p25
      %p32 = scmp.eq.s32.totalorder %s16, 1
      %p33 = por %p31, %p32
      %p34 = scmp.ne.s32.totalorder %s26, %s29
      %p35 = scmp.eq.s32.totalorder %s16, 0
      %p36 = por %p34, %p35
      %p37 = scmp.ne.s32.totalorder %s26, %s29
      %p38 = scmp.eq.s32.totalorder %s21, 1
      %p39 = por %p37, %p38
      %p40 = scmp.ne.s32.totalorder %s29, %s30
      %p41 = scmp.eq.s32.totalorder %s21, 0
      %p42 = por %p40, %p41
      %p43 = scmp.ne.s32.totalorder %s29, %s30
      %p44 = scmp.eq.s32.totalorder %s22, 1
      %p45 = por %p43, %p44
      %p47 = scmp.ne.s32.totalorder %s30, %s46
      %p48 = scmp.eq.s32.totalorder %s22, 0
      %p49 = por %p47, %p48
      %s51 = sadd.s32 %s50, 1
      %p54 = scmp.eq.s32.totalorder %s16, 1
      %p55 = scmp.ne.s32.totalorder %s50, %s52
      %p56 = scmp.eq.s32.totalorder %s16, 0
      %p57 = por %p55, %p56
      %p58 = scmp.ne.s32.totalorder %s50, %s52
      %p59 = scmp.eq.s32.totalorder %s21, 1
      %p60 = por %p58, %p59
      %p61 = scmp.ne.s32.totalorder %s52, %s53
      %p62 = scmp.eq.s32.totalorder %s21, 0
      %p63 = por %p61, %p62
      %p64 = scmp.ne.s32.totalorder %s52, %s53
      %p65 = scmp.eq.s32.totalorder %s22, 1
      %p66 = por %p64, %p65
      %p68 = scmp.ne.s32.totalorder %s53, %s67
      %p69 = scmp.eq.s32.totalorder %s22, 0
      %p70 = por %p68, %p69
      %s72 = sadd.s32 %s71, 1
      %p75 = scmp.eq.s32.totalorder %s16, 1
      %p76 = scmp.ne.s32.totalorder %s71, %s73
      %p77 = scmp.eq.s32.totalorder %s16, 0
      %p78 = por %p76, %p77
      %p79 = scmp.ne.s32.totalorder %s71, %s73
      %p80 = scmp.eq.s32.totalorder %s21, 1
      %p81 = por %p79, %p80
      %p82 = scmp.ne.s32.totalorder %s73, %s74
      %p83 = scmp.eq.s32.totalorder %s21, 0
      %p84 = por %p82, %p83
      %p85 = scmp.ne.s32.totalorder %s73, %s74
      %p86 = scmp.eq.s32.totalorder %s22, 1
      %p87 = por %p85, %p86
      %p89 = scmp.ne.s32.totalorder %s74, %s88
      %p90 = scmp.eq.s32.totalorder %s22, 0
      %p91 = por %p89, %p90
      %s93 = sadd.s32 %s92, 1
      %p96 = scmp.eq.s32.totalorder %s16, 1
      %p97 = scmp.ne.s32.totalorder %s92, %s94
      %p98 = scmp.eq.s32.totalorder %s16, 0
      %p99 = por %p97, %p98
      %p100 = scmp.ne.s32.totalorder %s92, %s94
      %p101 = scmp.eq.s32.totalorder %s21, 1
      %p102 = por %p100, %p101
      %p103 = scmp.ne.s32.totalorder %s94, %s95
      %p104 = scmp.eq.s32.totalorder %s21, 0
      %p105 = por %p103, %p104
      %p106 = scmp.ne.s32.totalorder %s94, %s95
      %p107 = scmp.eq.s32.totalorder %s22, 1
      %p108 = por %p106, %p107
      %p110 = scmp.ne.s32.totalorder %s95, %s109
      %p111 = scmp.eq.s32.totalorder %s22, 0
      %p112 = por %p110, %p111
      %s113 = ssub.s32 %s16, %s23
      %p114 = scmp.eq.s32.totalorder %s113, 0
      %s116 = sadd.s32 %s115, 1
      %s117 = scalar_select %p114, %s115, %s116
      %p120 = pneg %p114
      %p121 = scmp.eq.s32.totalorder %s16, 1
      %p122 = por %p120, %p121
      %p123 = scmp.ne.s32.totalorder %s115, %s118
      %p124 = scmp.eq.s32.totalorder %s16, 0
      %p125 = por %p123, %p124
      %p126 = scmp.ne.s32.totalorder %s115, %s118
      %p127 = scmp.eq.s32.totalorder %s21, 1
      %p128 = por %p126, %p127
      %p129 = scmp.ne.s32.totalorder %s118, %s119
      %p130 = scmp.eq.s32.totalorder %s21, 0
      %p131 = por %p129, %p130
      %p132 = scmp.ne.s32.totalorder %s118, %s119
      %p133 = scmp.eq.s32.totalorder %s22, 1
      %p134 = por %p132, %p133
      %p136 = scmp.ne.s32.totalorder %s119, %s135
      %p137 = scmp.eq.s32.totalorder %s22, 0
      %p138 = por %p136, %p137
      %p139 = scmp.le.s32.totalorder 1, %s16
      %p140 = scmp.lt.s32.totalorder %s16, 3
      %p141 = pnand %p139, %p140
      %p142 = pneg %p141
      // Predicated region
      $region9: #{tpu_custom_call.1} parent=5 // pred_check
        _
      $region10: #{tpu_custom_call.1} parent=5 // pred_check_branch
        %144 = sbr.rel (%p141) target = $region12
      $region11: #{tpu_custom_call.1} parent=5 // pred_region
        %s145 = ssub.s32 %s16, 1
        // Predicated region
        $region13: #{tpu_custom_call.1} parent=11 // pred_check
          %p146 = pneg %p63
        $region14: #{tpu_custom_call.1} parent=11 // pred_check_branch
          %148 = sbr.rel (%p146) target = $region16
        $region15: #{tpu_custom_call.1} parent=11 // pred_region
          _
        $region16: #{tpu_custom_call.1} parent=11 // pred_fallthru
          _
        // Predicated region
        $region17: #{tpu_custom_call.1} parent=11 // pred_check
          %p149 = pneg %p84
        $region18: #{tpu_custom_call.1} parent=11 // pred_check_branch
          %151 = sbr.rel (%p149) target = $region20
        $region19: #{tpu_custom_call.1} parent=11 // pred_region
          _
        $region20: #{tpu_custom_call.1} parent=11 // pred_fallthru
          _
        // Predicated region
        $region21: #{tpu_custom_call.1} parent=11 // pred_check
          %p152 = pneg %p105
        $region22: #{tpu_custom_call.1} parent=11 // pred_check_branch
          %154 = sbr.rel (%p152) target = $region24
        $region23: #{tpu_custom_call.1} parent=11 // pred_region
          _
        $region24: #{tpu_custom_call.1} parent=11 // pred_fallthru
          _
      $region12: #{tpu_custom_call.1} parent=5 // pred_fallthru
        _
      %p155 = scmp.lt.s32.totalorder %s16, 2
      // Predicated region
      $region25: #{tpu_custom_call.1} parent=5 // pred_check
        %p156 = pneg %p155
      $region26: #{tpu_custom_call.1} parent=5 // pred_check_branch
        %158 = sbr.rel (%p156) target = $region28
      $region27: #{tpu_custom_call.1} parent=5 // pred_region
        // Predicated region
        $region29: #{tpu_custom_call.1} parent=27 // pred_check
          %p159 = pneg %p36
        $region30: #{tpu_custom_call.1} parent=27 // pred_check_branch
          %161 = sbr.rel (%p159) target = $region32
        $region31: #{tpu_custom_call.1} parent=27 // pred_region
          %s162 = sand.u32 %s26, 1
          %s163 = scalar_lea.sflag [#allocation5], %s162
          %s164 = sand.u32 %s26, 1
          %s165 = smul.addr %s164, 256
          %s166 = scalar_lea.vmem [#allocation4], %s165
          %s168 = ssub.s32 4096, 4096
          %169 = vsyncadd %s163, %s168
          %s170 = smul.addr %s16, 32
          %s171 = smul.addr %s170, 128
          %s172 = scalar_lea.hbm %s0, %s171
          %s173 = sshll.u32 %s166, 4
          %s174 = int_to_ptr.vmem [resolvable:$true] %s173
          %179 = dma.hbm_to_vmem [thread:$0]  %s172, 4096, %s174, %s163, 128, 128, 8
        $region32: #{tpu_custom_call.1} parent=27 // pred_fallthru
          _
      $region28: #{tpu_custom_call.1} parent=5 // pred_fallthru
        _
      %p180 = scmp.le.s32.totalorder 1, %s16
      %p181 = scmp.lt.s32.totalorder %s16, 3
      %p182 = pnand %p180, %p181
      %p183 = pneg %p182
      // Predicated region
      $region33: #{tpu_custom_call.1} parent=5 // pred_check
        _
      $region34: #{tpu_custom_call.1} parent=5 // pred_check_branch
        %185 = sbr.rel (%p182) target = $region36
      $region35: #{tpu_custom_call.1} parent=5 // pred_region
        %s186 = ssub.s32 %s16, 1
        %s187 = sand.u32 %s29, 1
        %s188 = scalar_lea.sflag [#allocation5], %s187
        %s189 = sand.u32 %s29, 1
        %s190 = smul.addr %s189, 256
        %s191 = scalar_lea.vmem [#allocation4], %s190
        // Predicated region
        $region37: #{tpu_custom_call.1} parent=35 // pred_check
          %p192 = pneg %p42
        $region38: #{tpu_custom_call.1} parent=35 // pred_check_branch
          %194 = sbr.rel (%p192) target = $region40
        $region39: #{tpu_custom_call.1} parent=35 // pred_region
          %195 = dma.done %s188, 4096
        $region40: #{tpu_custom_call.1} parent=35 // pred_fallthru
          _
        %s196 = sand.u32 %s29, 1
        %s197 = scalar_lea.sflag [#allocation5], %s196
        %s198 = sand.u32 %s29, 1
        %s199 = smul.addr %s198, 256
        %s200 = scalar_lea.vmem [#allocation4], %s199
        %p201 = pneg %p42
        %p202 = pneg %p39
        %p203 = pneg %p63
        %p204 = pneg %p60
        %p205 = pneg %p84
        %p206 = pneg %p81
        %p207 = pneg %p105
        %p208 = pneg %p102
        %p209 = pneg %p131
        %p210 = pneg %p128
        %s211 = sand.u32 %s118, 1
        %s212 = scalar_lea.sflag [#allocation6], %s211
        %s213 = sand.u32 %s118, 1
        %s214 = smul.addr %s213, 16
        %s215 = scalar_lea.vmem [#allocation7], %s214
        %vm216 = vcmask 130048
        %217 = vst.msk [vmem:[#allocation2] sm:$0xff] %vm216, 0.0
        %218 = vst.msk [vmem:[#allocation2 + $0x8] sm:$0xff] %vm216, 0.0
        %vm219 = vcmask 123904
        %220 = vst.msk [vmem:[#allocation2 + $0x10] sm:$0x3] %vm219, 0.0
        %221 = vst.msk [vmem:[#allocation2 + $0x18] sm:$0xff] %vm216, 0.0
        %222 = vst.msk [vmem:[#allocation2 + $0x20] sm:$0xff] %vm216, 0.0
        %223 = vst.msk [vmem:[#allocation2 + $0x28] sm:$0x3] %vm219, 0.0
        %224 = vst.msk [vmem:[#allocation2 + $0x30] sm:$0xff] %vm216, 0.0
        %225 = vst.msk [vmem:[#allocation2 + $0x38] sm:$0xff] %vm216, 0.0
        %226 = vst.msk [vmem:[#allocation2 + $0x40] sm:$0x3] %vm219, 0.0
        %227 = vst.msk [vmem:[#allocation2 + $0x48] sm:$0xff] %vm216, 0.0
        %228 = vst.msk [vmem:[#allocation2 + $0x50] sm:$0xff] %vm216, 0.0
        %229 = vst.msk [vmem:[#allocation2 + $0x58] sm:$0x3] %vm219, 0.0
        %230 = vst.msk [vmem:[#allocation2 + $0x60] sm:$0xff] %vm216, 0.0
        %231 = vst.msk [vmem:[#allocation2 + $0x68] sm:$0xff] %vm216, 0.0
        %232 = vst.msk [vmem:[#allocation2 + $0x70] sm:$0x3] %vm219, 0.0
        %233 = vst.msk [vmem:[#allocation2 + $0x78] sm:$0xff] %vm216, 0.0
        %234 = vst.msk [vmem:[#allocation2 + $0x80] sm:$0xff] %vm216, 0.0
        %235 = vst.msk [vmem:[#allocation2 + $0x88] sm:$0x3] %vm219, 0.0
        %236 = vst.msk [vmem:[#allocation2 + $0x90] sm:$0xff] %vm216, 0.0
        %237 = vst.msk [vmem:[#allocation2 + $0x98] sm:$0xff] %vm216, 0.0
        %238 = vst.msk [vmem:[#allocation2 + $0xa0] sm:$0x3] %vm219, 0.0
        %239 = vst.msk [vmem:[#allocation2 + $0xa8] sm:$0xff] %vm216, 0.0
        %240 = vst.msk [vmem:[#allocation2 + $0xb0] sm:$0xff] %vm216, 0.0
        %241 = vst.msk [vmem:[#allocation2 + $0xb8] sm:$0x3] %vm219, 0.0
        %242 = vst.msk [vmem:[#allocation2 + $0xc0] sm:$0xff] %vm216, 0.0
        %243 = vst.msk [vmem:[#allocation2 + $0xc8] sm:$0xff] %vm216, 0.0
        %244 = vst.msk [vmem:[#allocation2 + $0xd0] sm:$0x3] %vm219, 0.0
        %245 = vst.msk [vmem:[#allocation2 + $0xd8] sm:$0xff] %vm216, 0.0
        %246 = vst.msk [vmem:[#allocation2 + $0xe0] sm:$0xff] %vm216, 0.0
        %247 = vst.msk [vmem:[#allocation2 + $0xe8] sm:$0x3] %vm219, 0.0
        %248 = vst.msk [vmem:[#allocation2 + $0xf0] sm:$0xff] %vm216, 0.0
        %249 = vst.msk [vmem:[#allocation2 + $0xf8] sm:$0xff] %vm216, 0.0
        %250 = vst.msk [vmem:[#allocation2 + $0x100] sm:$0x3] %vm219, 0.0
        %251 = vst.msk [vmem:[#allocation2 + $0x108] sm:$0xff] %vm216, 0.0
        %252 = vst.msk [vmem:[#allocation2 + $0x110] sm:$0xff] %vm216, 0.0
        %253 = vst.msk [vmem:[#allocation2 + $0x118] sm:$0x3] %vm219, 0.0
        %254 = vst.msk [vmem:[#allocation2 + $0x120] sm:$0xff] %vm216, 0.0
        %255 = vst.msk [vmem:[#allocation2 + $0x128] sm:$0xff] %vm216, 0.0
        %256 = vst.msk [vmem:[#allocation2 + $0x130] sm:$0x3] %vm219, 0.0
        %257 = vst.msk [vmem:[#allocation2 + $0x138] sm:$0xff] %vm216, 0.0
        %258 = vst.msk [vmem:[#allocation2 + $0x140] sm:$0xff] %vm216, 0.0
        %259 = vst.msk [vmem:[#allocation2 + $0x148] sm:$0x3] %vm219, 0.0
        %260 = vst.msk [vmem:[#allocation2 + $0x150] sm:$0xff] %vm216, 0.0
        %261 = vst.msk [vmem:[#allocation2 + $0x158] sm:$0xff] %vm216, 0.0
        %262 = vst.msk [vmem:[#allocation2 + $0x160] sm:$0x3] %vm219, 0.0
        %263 = vst.msk [vmem:[#allocation2 + $0x168] sm:$0xff] %vm216, 0.0
        %264 = vst.msk [vmem:[#allocation2 + $0x170] sm:$0xff] %vm216, 0.0
        %265 = vst.msk [vmem:[#allocation2 + $0x178] sm:$0x3] %vm219, 0.0
        %266 = vst.msk [vmem:[#allocation2 + $0x180] sm:$0xff] %vm216, 0.0
        %267 = vst.msk [vmem:[#allocation2 + $0x188] sm:$0xff] %vm216, 0.0
        %268 = vst.msk [vmem:[#allocation2 + $0x190] sm:$0x3] %vm219, 0.0
        %269 = vst.msk [vmem:[#allocation2 + $0x198] sm:$0xff] %vm216, 0.0
        %270 = vst.msk [vmem:[#allocation2 + $0x1a0] sm:$0xff] %vm216, 0.0
        %271 = vst.msk [vmem:[#allocation2 + $0x1a8] sm:$0x3] %vm219, 0.0
        %v272 = vld [vmem:[%s191] sm:$0xff]
        %v273 = vld [vmem:[%s191 + $0x8] sm:$0xff]
        %v274 = vld [vmem:[%s191 + $0x10] sm:$0xff]
        %v275 = vld [vmem:[%s191 + $0x18] sm:$0xff]
        %v276 = vld [vmem:[%s191 + $0x20] sm:$0xff]
        %v277 = vld [vmem:[%s191 + $0x28] sm:$0xff]
        %v278 = vld [vmem:[%s191 + $0x30] sm:$0xff]
        %v279 = vld [vmem:[%s191 + $0x38] sm:$0xff]
        %v280 = vld [vmem:[%s191 + $0x40] sm:$0xff]
        %v281 = vld [vmem:[%s191 + $0x48] sm:$0xff]
        %v282 = vld [vmem:[%s191 + $0x50] sm:$0xff]
        %v283 = vld [vmem:[%s191 + $0x58] sm:$0xff]
        %v284 = vld [vmem:[%s191 + $0x60] sm:$0xff]
        %v285 = vld [vmem:[%s191 + $0x68] sm:$0xff]
        %v286 = vld [vmem:[%s191 + $0x70] sm:$0xff]
        %v287 = vld [vmem:[%s191 + $0x78] sm:$0xff]
        %v288 = vld [vmem:[%s191 + $0x80] sm:$0xff]
        %v289 = vld [vmem:[%s191 + $0x88] sm:$0xff]
        %v290 = vld [vmem:[%s191 + $0x90] sm:$0xff]
        %v291 = vld [vmem:[%s191 + $0x98] sm:$0xff]
        %v292 = vld [vmem:[%s191 + $0xa0] sm:$0xff]
        %v293 = vld [vmem:[%s191 + $0xa8] sm:$0xff]
        %v294 = vld [vmem:[%s191 + $0xb0] sm:$0xff]
        %v295 = vld [vmem:[%s191 + $0xb8] sm:$0xff]
        %v296 = vld [vmem:[%s191 + $0xc0] sm:$0xff]
        %v297 = vld [vmem:[%s191 + $0xc8] sm:$0xff]
        %v298 = vld [vmem:[%s191 + $0xd0] sm:$0xff]
        %v299 = vld [vmem:[%s191 + $0xd8] sm:$0xff]
        %v300 = vld [vmem:[%s191 + $0xe0] sm:$0xff]
        %v301 = vld [vmem:[%s191 + $0xe8] sm:$0xff]
        %v302 = vld [vmem:[%s191 + $0xf0] sm:$0xff]
        %v303 = vld [vmem:[%s191 + $0xf8] sm:$0xff]
        %s304 = scalar_lea.vmem [#allocation2], 24
        %305 = vst.msk [vmem:[%s304 + $0x1] sm:$0xff] %vm216, %v272
        %306 = vst.msk [vmem:[%s304 + $0x9] sm:$0xff] %vm216, %v273
        %307 = vst.msk [vmem:[%s304 + $0x19] sm:$0xff] %vm216, %v274
        %308 = vst.msk [vmem:[%s304 + $0x21] sm:$0xff] %vm216, %v275
        %309 = vst.msk [vmem:[%s304 + $0x31] sm:$0xff] %vm216, %v276
        %310 = vst.msk [vmem:[%s304 + $0x39] sm:$0xff] %vm216, %v277
        %311 = vst.msk [vmem:[%s304 + $0x49] sm:$0xff] %vm216, %v278
        %312 = vst.msk [vmem:[%s304 + $0x51] sm:$0xff] %vm216, %v279
        %313 = vst.msk [vmem:[%s304 + $0x61] sm:$0xff] %vm216, %v280
        %314 = vst.msk [vmem:[%s304 + $0x69] sm:$0xff] %vm216, %v281
        %315 = vst.msk [vmem:[%s304 + $0x79] sm:$0xff] %vm216, %v282
        %316 = vst.msk [vmem:[%s304 + $0x81] sm:$0xff] %vm216, %v283
        %317 = vst.msk [vmem:[%s304 + $0x91] sm:$0xff] %vm216, %v284
        %318 = vst.msk [vmem:[%s304 + $0x99] sm:$0xff] %vm216, %v285
        %319 = vst.msk [vmem:[%s304 + $0xa9] sm:$0xff] %vm216, %v286
        %320 = vst.msk [vmem:[%s304 + $0xb1] sm:$0xff] %vm216, %v287
        %321 = vst.msk [vmem:[%s304 + $0xc1] sm:$0xff] %vm216, %v288
        %322 = vst.msk [vmem:[%s304 + $0xc9] sm:$0xff] %vm216, %v289
        %323 = vst.msk [vmem:[%s304 + $0xd9] sm:$0xff] %vm216, %v290
        %324 = vst.msk [vmem:[%s304 + $0xe1] sm:$0xff] %vm216, %v291
        %325 = vst.msk [vmem:[%s304 + $0xf1] sm:$0xff] %vm216, %v292
        %326 = vst.msk [vmem:[%s304 + $0xf9] sm:$0xff] %vm216, %v293
        %327 = vst.msk [vmem:[%s304 + $0x109] sm:$0xff] %vm216, %v294
        %328 = vst.msk [vmem:[%s304 + $0x111] sm:$0xff] %vm216, %v295
        %329 = vst.msk [vmem:[%s304 + $0x121] sm:$0xff] %vm216, %v296
        %330 = vst.msk [vmem:[%s304 + $0x129] sm:$0xff] %vm216, %v297
        %331 = vst.msk [vmem:[%s304 + $0x139] sm:$0xff] %vm216, %v298
        %332 = vst.msk [vmem:[%s304 + $0x141] sm:$0xff] %vm216, %v299
        %333 = vst.msk [vmem:[%s304 + $0x151] sm:$0xff] %vm216, %v300
        %334 = vst.msk [vmem:[%s304 + $0x159] sm:$0xff] %vm216, %v301
        %335 = vst.msk [vmem:[%s304 + $0x169] sm:$0xff] %vm216, %v302
        %336 = vst.msk [vmem:[%s304 + $0x171] sm:$0xff] %vm216, %v303
        %v337 = vld [vmem:[#allocation2] sm:$0xff]
        %v338 = vld [vmem:[#allocation2 + $0x8] sm:$0xff]
        %v339 = vld [vmem:[#allocation2 + $0x18] sm:$0xff]
        %v340 = vld [vmem:[#allocation2 + $0x20] sm:$0xff]
        %v341 = vld [vmem:[#allocation2 + $0x30] sm:$0xff]
        %v342 = vld [vmem:[#allocation2 + $0x38] sm:$0xff]
        %v343 = vld [vmem:[#allocation2 + $0x48] sm:$0xff]
        %v344 = vld [vmem:[#allocation2 + $0x50] sm:$0xff]
        %v345 = vld [vmem:[#allocation2 + $0x60] sm:$0xff]
        %v346 = vld [vmem:[#allocation2 + $0x68] sm:$0xff]
        %v347 = vld [vmem:[#allocation2 + $0x78] sm:$0xff]
        %v348 = vld [vmem:[#allocation2 + $0x80] sm:$0xff]
        %v349 = vld [vmem:[#allocation2 + $0x90] sm:$0xff]
        %v350 = vld [vmem:[#allocation2 + $0x98] sm:$0xff]
        %v351 = vld [vmem:[#allocation2 + $0xa8] sm:$0xff]
        %v352 = vld [vmem:[#allocation2 + $0xb0] sm:$0xff]
        %v353 = vld [vmem:[#allocation2 + $0xc0] sm:$0xff]
        %v354 = vld [vmem:[#allocation2 + $0xc8] sm:$0xff]
        %v355 = vld [vmem:[#allocation2 + $0xd8] sm:$0xff]
        %v356 = vld [vmem:[#allocation2 + $0xe0] sm:$0xff]
        %v357 = vld [vmem:[#allocation2 + $0xf0] sm:$0xff]
        %v358 = vld [vmem:[#allocation2 + $0xf8] sm:$0xff]
        %v359 = vld [vmem:[#allocation2 + $0x108] sm:$0xff]
        %v360 = vld [vmem:[#allocation2 + $0x110] sm:$0xff]
        %v361 = vld [vmem:[#allocation2 + $0x120] sm:$0xff]
        %v362 = vld [vmem:[#allocation2 + $0x128] sm:$0xff]
        %v363 = vld [vmem:[#allocation2 + $0x138] sm:$0xff]
        %v364 = vld [vmem:[#allocation2 + $0x140] sm:$0xff]
        %v365 = vld [vmem:[#allocation2 + $0x150] sm:$0xff]
        %v366 = vld [vmem:[#allocation2 + $0x158] sm:$0xff]
        %v367 = vld [vmem:[#allocation2 + $0x168] sm:$0xff]
        %v368 = vld [vmem:[#allocation2 + $0x170] sm:$0xff]
        %v369 = vpack.c.bf16 %v338, %v337
        %v370 = vpack.c.bf16 %v340, %v339
        %v371 = vpack.c.bf16 %v342, %v341
        %v372 = vpack.c.bf16 %v344, %v343
        %v373 = vpack.c.bf16 %v346, %v345
        %v374 = vpack.c.bf16 %v348, %v347
        %v375 = vpack.c.bf16 %v350, %v349
        %v376 = vpack.c.bf16 %v352, %v351
        %v377 = vpack.c.bf16 %v354, %v353
        %v378 = vpack.c.bf16 %v356, %v355
        %v379 = vpack.c.bf16 %v358, %v357
        %v380 = vpack.c.bf16 %v360, %v359
        %v381 = vpack.c.bf16 %v362, %v361
        %v382 = vpack.c.bf16 %v364, %v363
        %v383 = vpack.c.bf16 %v366, %v365
        %v384 = vpack.c.bf16 %v368, %v367
        %v401 = vunpack.c.l.b16 %v369
        %v402 = vunpack.c.h.b16 %v369
        %v403 = vunpack.c.l.b16 %v370
        %v404 = vunpack.c.h.b16 %v370
        %v405 = vunpack.c.l.b16 %v371
        %v406 = vunpack.c.h.b16 %v371
        %v407 = vunpack.c.l.b16 %v372
        %v408 = vunpack.c.h.b16 %v372
        %v409 = vunpack.c.l.b16 %v373
        %v410 = vunpack.c.h.b16 %v373
        %v411 = vunpack.c.l.b16 %v374
        %v412 = vunpack.c.h.b16 %v374
        %v413 = vunpack.c.l.b16 %v375
        %v414 = vunpack.c.h.b16 %v375
        %v415 = vunpack.c.l.b16 %v376
        %v416 = vunpack.c.h.b16 %v376
        %v417 = vunpack.c.l.b16 %v377
        %v418 = vunpack.c.h.b16 %v377
        %v419 = vunpack.c.l.b16 %v378
        %v420 = vunpack.c.h.b16 %v378
        %v421 = vunpack.c.l.b16 %v379
        %v422 = vunpack.c.h.b16 %v379
        %v423 = vunpack.c.l.b16 %v380
        %v424 = vunpack.c.h.b16 %v380
        %v425 = vunpack.c.l.b16 %v381
        %v426 = vunpack.c.h.b16 %v381
        %v427 = vunpack.c.l.b16 %v382
        %v428 = vunpack.c.h.b16 %v382
        %v429 = vunpack.c.l.b16 %v383
        %v430 = vunpack.c.h.b16 %v383
        %v431 = vunpack.c.l.b16 %v384
        %v432 = vunpack.c.h.b16 %v384
        %v433 = vpack.c.b16 %v401, %v401
        %v434 = vpack.c.b16 %v402, %v402
        %v435 = vpack.c.b16 %v403, %v403
        %v436 = vpack.c.b16 %v404, %v404
        %v437 = vpack.c.b16 %v405, %v405
        %v438 = vpack.c.b16 %v406, %v406
        %v439 = vpack.c.b16 %v407, %v407
        %v440 = vpack.c.b16 %v408, %v408
        %v441 = vpack.c.b16 %v409, %v409
        %v442 = vpack.c.b16 %v410, %v410
        %v443 = vpack.c.b16 %v411, %v411
        %v444 = vpack.c.b16 %v412, %v412
        %v445 = vpack.c.b16 %v413, %v413
        %v446 = vpack.c.b16 %v414, %v414
        %v447 = vpack.c.b16 %v415, %v415
        %v448 = vpack.c.b16 %v416, %v416
        %v449 = vpack.c.b16 %v417, %v417
        %v450 = vpack.c.b16 %v418, %v418
        %v451 = vpack.c.b16 %v419, %v419
        %v452 = vpack.c.b16 %v420, %v420
        %v453 = vpack.c.b16 %v421, %v421
        %v454 = vpack.c.b16 %v422, %v422
        %v455 = vpack.c.b16 %v423, %v423
        %v456 = vpack.c.b16 %v424, %v424
        %v457 = vpack.c.b16 %v425, %v425
        %v458 = vpack.c.b16 %v426, %v426
        %v459 = vpack.c.b16 %v427, %v427
        %v460 = vpack.c.b16 %v428, %v428
        %v461 = vpack.c.b16 %v429, %v429
        %v462 = vpack.c.b16 %v430, %v430
        %v463 = vpack.c.b16 %v431, %v431
        %v464 = vpack.c.b16 %v432, %v432
        %vm497 = vcmask 125952
        %498 = vst.msk [vmem:[#allocation3] sm:$0xf] %vm497, %v433
        %499 = vst.msk [vmem:[#allocation3 + $0x8] sm:$0xf] %vm497, %v434
        %500 = vst.msk [vmem:[#allocation3 + $0x10] sm:$0xf] %vm497, %v435
        %501 = vst.msk [vmem:[#allocation3 + $0x18] sm:$0xf] %vm497, %v436
        %502 = vst.msk [vmem:[#allocation3 + $0x20] sm:$0xf] %vm497, %v437
        %503 = vst.msk [vmem:[#allocation3 + $0x28] sm:$0xf] %vm497, %v438
        %504 = vst.msk [vmem:[#allocation3 + $0x30] sm:$0xf] %vm497, %v439
        %505 = vst.msk [vmem:[#allocation3 + $0x38] sm:$0xf] %vm497, %v440
        %506 = vst.msk [vmem:[#allocation3 + $0x40] sm:$0xf] %vm497, %v441
        %507 = vst.msk [vmem:[#allocation3 + $0x48] sm:$0xf] %vm497, %v442
        %508 = vst.msk [vmem:[#allocation3 + $0x50] sm:$0xf] %vm497, %v443
        %509 = vst.msk [vmem:[#allocation3 + $0x58] sm:$0xf] %vm497, %v444
        %510 = vst.msk [vmem:[#allocation3 + $0x60] sm:$0xf] %vm497, %v445
        %511 = vst.msk [vmem:[#allocation3 + $0x68] sm:$0xf] %vm497, %v446
        %512 = vst.msk [vmem:[#allocation3 + $0x70] sm:$0xf] %vm497, %v447
        %513 = vst.msk [vmem:[#allocation3 + $0x78] sm:$0xf] %vm497, %v448
        %514 = vst.msk [vmem:[#allocation3 + $0x80] sm:$0xf] %vm497, %v449
        %515 = vst.msk [vmem:[#allocation3 + $0x88] sm:$0xf] %vm497, %v450
        %516 = vst.msk [vmem:[#allocation3 + $0x90] sm:$0xf] %vm497, %v451
        %517 = vst.msk [vmem:[#allocation3 + $0x98] sm:$0xf] %vm497, %v452
        %518 = vst.msk [vmem:[#allocation3 + $0xa0] sm:$0xf] %vm497, %v453
        %519 = vst.msk [vmem:[#allocation3 + $0xa8] sm:$0xf] %vm497, %v454
        %520 = vst.msk [vmem:[#allocation3 + $0xb0] sm:$0xf] %vm497, %v455
        %521 = vst.msk [vmem:[#allocation3 + $0xb8] sm:$0xf] %vm497, %v456
        %522 = vst.msk [vmem:[#allocation3 + $0xc0] sm:$0xf] %vm497, %v457
        %523 = vst.msk [vmem:[#allocation3 + $0xc8] sm:$0xf] %vm497, %v458
        %524 = vst.msk [vmem:[#allocation3 + $0xd0] sm:$0xf] %vm497, %v459
        %525 = vst.msk [vmem:[#allocation3 + $0xd8] sm:$0xf] %vm497, %v460
        %526 = vst.msk [vmem:[#allocation3 + $0xe0] sm:$0xf] %vm497, %v461
        %527 = vst.msk [vmem:[#allocation3 + $0xe8] sm:$0xf] %vm497, %v462
        %528 = vst.msk [vmem:[#allocation3 + $0xf0] sm:$0xf] %vm497, %v463
        %529 = vst.msk [vmem:[#allocation3 + $0xf8] sm:$0xf] %vm497, %v464
        %v530 = vld [vmem:[#allocation2 + $0x1] sm:$0xff]
        %v531 = vld [vmem:[#allocation2 + $0x9] sm:$0xff]
        %v532 = vld [vmem:[#allocation2 + $0x19] sm:$0xff]
        %v533 = vld [vmem:[#allocation2 + $0x21] sm:$0xff]
        %v534 = vld [vmem:[#allocation2 + $0x31] sm:$0xff]
        %v535 = vld [vmem:[#allocation2 + $0x39] sm:$0xff]
        %v536 = vld [vmem:[#allocation2 + $0x49] sm:$0xff]
        %v537 = vld [vmem:[#allocation2 + $0x51] sm:$0xff]
        %v538 = vld [vmem:[#allocation2 + $0x61] sm:$0xff]
        %v539 = vld [vmem:[#allocation2 + $0x69] sm:$0xff]
        %v540 = vld [vmem:[#allocation2 + $0x79] sm:$0xff]
        %v541 = vld [vmem:[#allocation2 + $0x81] sm:$0xff]
        %v542 = vld [vmem:[#allocation2 + $0x91] sm:$0xff]
        %v543 = vld [vmem:[#allocation2 + $0x99] sm:$0xff]
        %v544 = vld [vmem:[#allocation2 + $0xa9] sm:$0xff]
        %v545 = vld [vmem:[#allocation2 + $0xb1] sm:$0xff]
        %v546 = vld [vmem:[#allocation2 + $0xc1] sm:$0xff]
        %v547 = vld [vmem:[#allocation2 + $0xc9] sm:$0xff]
        %v548 = vld [vmem:[#allocation2 + $0xd9] sm:$0xff]
        %v549 = vld [vmem:[#allocation2 + $0xe1] sm:$0xff]
        %v550 = vld [vmem:[#allocation2 + $0xf1] sm:$0xff]
        %v551 = vld [vmem:[#allocation2 + $0xf9] sm:$0xff]
        %v552 = vld [vmem:[#allocation2 + $0x109] sm:$0xff]
        %v553 = vld [vmem:[#allocation2 + $0x111] sm:$0xff]
        %v554 = vld [vmem:[#allocation2 + $0x121] sm:$0xff]
        %v555 = vld [vmem:[#allocation2 + $0x129] sm:$0xff]
        %v556 = vld [vmem:[#allocation2 + $0x139] sm:$0xff]
        %v557 = vld [vmem:[#allocation2 + $0x141] sm:$0xff]
        %v558 = vld [vmem:[#allocation2 + $0x151] sm:$0xff]
        %v559 = vld [vmem:[#allocation2 + $0x159] sm:$0xff]
        %v560 = vld [vmem:[#allocation2 + $0x169] sm:$0xff]
        %v561 = vld [vmem:[#allocation2 + $0x171] sm:$0xff]
        %v562 = vpack.c.bf16 %v531, %v530
        %v563 = vpack.c.bf16 %v533, %v532
        %v564 = vpack.c.bf16 %v535, %v534
        %v565 = vpack.c.bf16 %v537, %v536
        %v566 = vpack.c.bf16 %v539, %v538
        %v567 = vpack.c.bf16 %v541, %v540
        %v568 = vpack.c.bf16 %v543, %v542
        %v569 = vpack.c.bf16 %v545, %v544
        %v570 = vpack.c.bf16 %v547, %v546
        %v571 = vpack.c.bf16 %v549, %v548
        %v572 = vpack.c.bf16 %v551, %v550
        %v573 = vpack.c.bf16 %v553, %v552
        %v574 = vpack.c.bf16 %v555, %v554
        %v575 = vpack.c.bf16 %v557, %v556
        %v576 = vpack.c.bf16 %v559, %v558
        %v577 = vpack.c.bf16 %v561, %v560
        %v594 = vunpack.c.l.b16 %v562
        %v595 = vunpack.c.h.b16 %v562
        %v596 = vunpack.c.l.b16 %v563
        %v597 = vunpack.c.h.b16 %v563
        %v598 = vunpack.c.l.b16 %v564
        %v599 = vunpack.c.h.b16 %v564
        %v600 = vunpack.c.l.b16 %v565
        %v601 = vunpack.c.h.b16 %v565
        %v602 = vunpack.c.l.b16 %v566
        %v603 = vunpack.c.h.b16 %v566
        %v604 = vunpack.c.l.b16 %v567
        %v605 = vunpack.c.h.b16 %v567
        %v606 = vunpack.c.l.b16 %v568
        %v607 = vunpack.c.h.b16 %v568
        %v608 = vunpack.c.l.b16 %v569
        %v609 = vunpack.c.h.b16 %v569
        %v610 = vunpack.c.l.b16 %v570
        %v611 = vunpack.c.h.b16 %v570
        %v612 = vunpack.c.l.b16 %v571
        %v613 = vunpack.c.h.b16 %v571
        %v614 = vunpack.c.l.b16 %v572
        %v615 = vunpack.c.h.b16 %v572
        %v616 = vunpack.c.l.b16 %v573
        %v617 = vunpack.c.h.b16 %v573
        %v618 = vunpack.c.l.b16 %v574
        %v619 = vunpack.c.h.b16 %v574
        %v620 = vunpack.c.l.b16 %v575
        %v621 = vunpack.c.h.b16 %v575
        %v622 = vunpack.c.l.b16 %v576
        %v623 = vunpack.c.h.b16 %v576
        %v624 = vunpack.c.l.b16 %v577
        %v625 = vunpack.c.h.b16 %v577
        %v626 = vpack.c.b16 %v594, %v594
        %v627 = vpack.c.b16 %v595, %v595
        %v628 = vpack.c.b16 %v596, %v596
        %v629 = vpack.c.b16 %v597, %v597
        %v630 = vpack.c.b16 %v598, %v598
        %v631 = vpack.c.b16 %v599, %v599
        %v632 = vpack.c.b16 %v600, %v600
        %v633 = vpack.c.b16 %v601, %v601
        %v634 = vpack.c.b16 %v602, %v602
        %v635 = vpack.c.b16 %v603, %v603
        %v636 = vpack.c.b16 %v604, %v604
        %v637 = vpack.c.b16 %v605, %v605
        %v638 = vpack.c.b16 %v606, %v606
        %v639 = vpack.c.b16 %v607, %v607
        %v640 = vpack.c.b16 %v608, %v608
        %v641 = vpack.c.b16 %v609, %v609
        %v642 = vpack.c.b16 %v610, %v610
        %v643 = vpack.c.b16 %v611, %v611
        %v644 = vpack.c.b16 %v612, %v612
        %v645 = vpack.c.b16 %v613, %v613
        %v646 = vpack.c.b16 %v614, %v614
        %v647 = vpack.c.b16 %v615, %v615
        %v648 = vpack.c.b16 %v616, %v616
        %v649 = vpack.c.b16 %v617, %v617
        %v650 = vpack.c.b16 %v618, %v618
        %v651 = vpack.c.b16 %v619, %v619
        %v652 = vpack.c.b16 %v620, %v620
        %v653 = vpack.c.b16 %v621, %v621
        %v654 = vpack.c.b16 %v622, %v622
        %v655 = vpack.c.b16 %v623, %v623
        %v656 = vpack.c.b16 %v624, %v624
        %v657 = vpack.c.b16 %v625, %v625
        %658 = vrot.lane.b32.xlu0 %v626, 16
        %v659 = vpop.permute.xlu0 %658
        %660 = vrot.lane.b32.xlu0 %v627, 16
        %v661 = vpop.permute.xlu0 %660
        %662 = vrot.lane.b32.xlu0 %v628, 16
        %v663 = vpop.permute.xlu0 %662
        %664 = vrot.lane.b32.xlu0 %v629, 16
        %v665 = vpop.permute.xlu0 %664
        %666 = vrot.lane.b32.xlu0 %v630, 16
        %v667 = vpop.permute.xlu0 %666
        %668 = vrot.lane.b32.xlu0 %v631, 16
        %v669 = vpop.permute.xlu0 %668
        %670 = vrot.lane.b32.xlu0 %v632, 16
        %v671 = vpop.permute.xlu0 %670
        %672 = vrot.lane.b32.xlu0 %v633, 16
        %v673 = vpop.permute.xlu0 %672
        %674 = vrot.lane.b32.xlu0 %v634, 16
        %v675 = vpop.permute.xlu0 %674
        %676 = vrot.lane.b32.xlu0 %v635, 16
        %v677 = vpop.permute.xlu0 %676
        %678 = vrot.lane.b32.xlu0 %v636, 16
        %v679 = vpop.permute.xlu0 %678
        %680 = vrot.lane.b32.xlu0 %v637, 16
        %v681 = vpop.permute.xlu0 %680
        %682 = vrot.lane.b32.xlu0 %v638, 16
        %v683 = vpop.permute.xlu0 %682
        %684 = vrot.lane.b32.xlu0 %v639, 16
        %v685 = vpop.permute.xlu0 %684
        %686 = vrot.lane.b32.xlu0 %v640, 16
        %v687 = vpop.permute.xlu0 %686
        %688 = vrot.lane.b32.xlu0 %v641, 16
        %v689 = vpop.permute.xlu0 %688
        %690 = vrot.lane.b32.xlu0 %v642, 16
        %v691 = vpop.permute.xlu0 %690
        %692 = vrot.lane.b32.xlu0 %v643, 16
        %v693 = vpop.permute.xlu0 %692
        %694 = vrot.lane.b32.xlu0 %v644, 16
        %v695 = vpop.permute.xlu0 %694
        %696 = vrot.lane.b32.xlu0 %v645, 16
        %v697 = vpop.permute.xlu0 %696
        %698 = vrot.lane.b32.xlu0 %v646, 16
        %v699 = vpop.permute.xlu0 %698
        %700 = vrot.lane.b32.xlu0 %v647, 16
        %v701 = vpop.permute.xlu0 %700
        %702 = vrot.lane.b32.xlu0 %v648, 16
        %v703 = vpop.permute.xlu0 %702
        %704 = vrot.lane.b32.xlu0 %v649, 16
        %v705 = vpop.permute.xlu0 %704
        %706 = vrot.lane.b32.xlu0 %v650, 16
        %v707 = vpop.permute.xlu0 %706
        %708 = vrot.lane.b32.xlu0 %v651, 16
        %v709 = vpop.permute.xlu0 %708
        %710 = vrot.lane.b32.xlu0 %v652, 16
        %v711 = vpop.permute.xlu0 %710
        %712 = vrot.lane.b32.xlu0 %v653, 16
        %v713 = vpop.permute.xlu0 %712
        %714 = vrot.lane.b32.xlu0 %v654, 16
        %v715 = vpop.permute.xlu0 %714
        %716 = vrot.lane.b32.xlu0 %v655, 16
        %v717 = vpop.permute.xlu0 %716
        %718 = vrot.lane.b32.xlu0 %v656, 16
        %v719 = vpop.permute.xlu0 %718
        %720 = vrot.lane.b32.xlu0 %v657, 16
        %v721 = vpop.permute.xlu0 %720
        %vm754 = vcmask 257152
        %755 = vst.msk [vmem:[#allocation3] sm:$0xf] %vm754, %v659
        %756 = vst.msk [vmem:[#allocation3 + $0x8] sm:$0xf] %vm754, %v661
        %757 = vst.msk [vmem:[#allocation3 + $0x10] sm:$0xf] %vm754, %v663
        %758 = vst.msk [vmem:[#allocation3 + $0x18] sm:$0xf] %vm754, %v665
        %759 = vst.msk [vmem:[#allocation3 + $0x20] sm:$0xf] %vm754, %v667
        %760 = vst.msk [vmem:[#allocation3 + $0x28] sm:$0xf] %vm754, %v669
        %761 = vst.msk [vmem:[#allocation3 + $0x30] sm:$0xf] %vm754, %v671
        %762 = vst.msk [vmem:[#allocation3 + $0x38] sm:$0xf] %vm754, %v673
        %763 = vst.msk [vmem:[#allocation3 + $0x40] sm:$0xf] %vm754, %v675
        %764 = vst.msk [vmem:[#allocation3 + $0x48] sm:$0xf] %vm754, %v677
        %765 = vst.msk [vmem:[#allocation3 + $0x50] sm:$0xf] %vm754, %v679
        %766 = vst.msk [vmem:[#allocation3 + $0x58] sm:$0xf] %vm754, %v681
        %767 = vst.msk [vmem:[#allocation3 + $0x60] sm:$0xf] %vm754, %v683
        %768 = vst.msk [vmem:[#allocation3 + $0x68] sm:$0xf] %vm754, %v685
        %769 = vst.msk [vmem:[#allocation3 + $0x70] sm:$0xf] %vm754, %v687
        %770 = vst.msk [vmem:[#allocation3 + $0x78] sm:$0xf] %vm754, %v689
        %771 = vst.msk [vmem:[#allocation3 + $0x80] sm:$0xf] %vm754, %v691
        %772 = vst.msk [vmem:[#allocation3 + $0x88] sm:$0xf] %vm754, %v693
        %773 = vst.msk [vmem:[#allocation3 + $0x90] sm:$0xf] %vm754, %v695
        %774 = vst.msk [vmem:[#allocation3 + $0x98] sm:$0xf] %vm754, %v697
        %775 = vst.msk [vmem:[#allocation3 + $0xa0] sm:$0xf] %vm754, %v699
        %776 = vst.msk [vmem:[#allocation3 + $0xa8] sm:$0xf] %vm754, %v701
        %777 = vst.msk [vmem:[#allocation3 + $0xb0] sm:$0xf] %vm754, %v703
        %778 = vst.msk [vmem:[#allocation3 + $0xb8] sm:$0xf] %vm754, %v705
        %779 = vst.msk [vmem:[#allocation3 + $0xc0] sm:$0xf] %vm754, %v707
        %780 = vst.msk [vmem:[#allocation3 + $0xc8] sm:$0xf] %vm754, %v709
        %781 = vst.msk [vmem:[#allocation3 + $0xd0] sm:$0xf] %vm754, %v711
        %782 = vst.msk [vmem:[#allocation3 + $0xd8] sm:$0xf] %vm754, %v713
        %783 = vst.msk [vmem:[#allocation3 + $0xe0] sm:$0xf] %vm754, %v715
        %784 = vst.msk [vmem:[#allocation3 + $0xe8] sm:$0xf] %vm754, %v717
        %785 = vst.msk [vmem:[#allocation3 + $0xf0] sm:$0xf] %vm754, %v719
        %786 = vst.msk [vmem:[#allocation3 + $0xf8] sm:$0xf] %vm754, %v721
        %v787 = vld [vmem:[#allocation2 + $0x2] sm:$0xff]
        %v788 = vld [vmem:[#allocation2 + $0xa] sm:$0xff]
        %v789 = vld [vmem:[#allocation2 + $0x1a] sm:$0xff]
        %v790 = vld [vmem:[#allocation2 + $0x22] sm:$0xff]
        %v791 = vld [vmem:[#allocation2 + $0x32] sm:$0xff]
        %v792 = vld [vmem:[#allocation2 + $0x3a] sm:$0xff]
        %v793 = vld [vmem:[#allocation2 + $0x4a] sm:$0xff]
        %v794 = vld [vmem:[#allocation2 + $0x52] sm:$0xff]
        %v795 = vld [vmem:[#allocation2 + $0x62] sm:$0xff]
        %v796 = vld [vmem:[#allocation2 + $0x6a] sm:$0xff]
        %v797 = vld [vmem:[#allocation2 + $0x7a] sm:$0xff]
        %v798 = vld [vmem:[#allocation2 + $0x82] sm:$0xff]
        %v799 = vld [vmem:[#allocation2 + $0x92] sm:$0xff]
        %v800 = vld [vmem:[#allocation2 + $0x9a] sm:$0xff]
        %v801 = vld [vmem:[#allocation2 + $0xaa] sm:$0xff]
        %v802 = vld [vmem:[#allocation2 + $0xb2] sm:$0xff]
        %v803 = vld [vmem:[#allocation2 + $0xc2] sm:$0xff]
        %v804 = vld [vmem:[#allocation2 + $0xca] sm:$0xff]
        %v805 = vld [vmem:[#allocation2 + $0xda] sm:$0xff]
        %v806 = vld [vmem:[#allocation2 + $0xe2] sm:$0xff]
        %v807 = vld [vmem:[#allocation2 + $0xf2] sm:$0xff]
        %v808 = vld [vmem:[#allocation2 + $0xfa] sm:$0xff]
        %v809 = vld [vmem:[#allocation2 + $0x10a] sm:$0xff]
        %v810 = vld [vmem:[#allocation2 + $0x112] sm:$0xff]
        %v811 = vld [vmem:[#allocation2 + $0x122] sm:$0xff]
        %v812 = vld [vmem:[#allocation2 + $0x12a] sm:$0xff]
        %v813 = vld [vmem:[#allocation2 + $0x13a] sm:$0xff]
        %v814 = vld [vmem:[#allocation2 + $0x142] sm:$0xff]
        %v815 = vld [vmem:[#allocation2 + $0x152] sm:$0xff]
        %v816 = vld [vmem:[#allocation2 + $0x15a] sm:$0xff]
        %v817 = vld [vmem:[#allocation2 + $0x16a] sm:$0xff]
        %v818 = vld [vmem:[#allocation2 + $0x172] sm:$0xff]
        %v819 = vpack.c.bf16 %v788, %v787
        %v820 = vpack.c.bf16 %v790, %v789
        %v821 = vpack.c.bf16 %v792, %v791
        %v822 = vpack.c.bf16 %v794, %v793
        %v823 = vpack.c.bf16 %v796, %v795
        %v824 = vpack.c.bf16 %v798, %v797
        %v825 = vpack.c.bf16 %v800, %v799
        %v826 = vpack.c.bf16 %v802, %v801
        %v827 = vpack.c.bf16 %v804, %v803
        %v828 = vpack.c.bf16 %v806, %v805
        %v829 = vpack.c.bf16 %v808, %v807
        %v830 = vpack.c.bf16 %v810, %v809
        %v831 = vpack.c.bf16 %v812, %v811
        %v832 = vpack.c.bf16 %v814, %v813
        %v833 = vpack.c.bf16 %v816, %v815
        %v834 = vpack.c.bf16 %v818, %v817
        %v851 = vunpack.c.l.b16 %v819
        %v852 = vunpack.c.h.b16 %v819
        %v853 = vunpack.c.l.b16 %v820
        %v854 = vunpack.c.h.b16 %v820
        %v855 = vunpack.c.l.b16 %v821
        %v856 = vunpack.c.h.b16 %v821
        %v857 = vunpack.c.l.b16 %v822
        %v858 = vunpack.c.h.b16 %v822
        %v859 = vunpack.c.l.b16 %v823
        %v860 = vunpack.c.h.b16 %v823
        %v861 = vunpack.c.l.b16 %v824
        %v862 = vunpack.c.h.b16 %v824
        %v863 = vunpack.c.l.b16 %v825
        %v864 = vunpack.c.h.b16 %v825
        %v865 = vunpack.c.l.b16 %v826
        %v866 = vunpack.c.h.b16 %v826
        %v867 = vunpack.c.l.b16 %v827
        %v868 = vunpack.c.h.b16 %v827
        %v869 = vunpack.c.l.b16 %v828
        %v870 = vunpack.c.h.b16 %v828
        %v871 = vunpack.c.l.b16 %v829
        %v872 = vunpack.c.h.b16 %v829
        %v873 = vunpack.c.l.b16 %v830
        %v874 = vunpack.c.h.b16 %v830
        %v875 = vunpack.c.l.b16 %v831
        %v876 = vunpack.c.h.b16 %v831
        %v877 = vunpack.c.l.b16 %v832
        %v878 = vunpack.c.h.b16 %v832
        %v879 = vunpack.c.l.b16 %v833
        %v880 = vunpack.c.h.b16 %v833
        %v881 = vunpack.c.l.b16 %v834
        %v882 = vunpack.c.h.b16 %v834
        %v883 = vpack.c.b16 %v851, %v851
        %v884 = vpack.c.b16 %v852, %v852
        %v885 = vpack.c.b16 %v853, %v853
        %v886 = vpack.c.b16 %v854, %v854
        %v887 = vpack.c.b16 %v855, %v855
        %v888 = vpack.c.b16 %v856, %v856
        %v889 = vpack.c.b16 %v857, %v857
        %v890 = vpack.c.b16 %v858, %v858
        %v891 = vpack.c.b16 %v859, %v859
        %v892 = vpack.c.b16 %v860, %v860
        %v893 = vpack.c.b16 %v861, %v861
        %v894 = vpack.c.b16 %v862, %v862
        %v895 = vpack.c.b16 %v863, %v863
        %v896 = vpack.c.b16 %v864, %v864
        %v897 = vpack.c.b16 %v865, %v865
        %v898 = vpack.c.b16 %v866, %v866
        %v899 = vpack.c.b16 %v867, %v867
        %v900 = vpack.c.b16 %v868, %v868
        %v901 = vpack.c.b16 %v869, %v869
        %v902 = vpack.c.b16 %v870, %v870
        %v903 = vpack.c.b16 %v871, %v871
        %v904 = vpack.c.b16 %v872, %v872
        %v905 = vpack.c.b16 %v873, %v873
        %v906 = vpack.c.b16 %v874, %v874
        %v907 = vpack.c.b16 %v875, %v875
        %v908 = vpack.c.b16 %v876, %v876
        %v909 = vpack.c.b16 %v877, %v877
        %v910 = vpack.c.b16 %v878, %v878
        %v911 = vpack.c.b16 %v879, %v879
        %v912 = vpack.c.b16 %v880, %v880
        %v913 = vpack.c.b16 %v881, %v881
        %v914 = vpack.c.b16 %v882, %v882
        %915 = vrot.lane.b32.xlu0 %v883, 32
        %v916 = vpop.permute.xlu0 %915
        %917 = vrot.lane.b32.xlu0 %v884, 32
        %v918 = vpop.permute.xlu0 %917
        %919 = vrot.lane.b32.xlu0 %v885, 32
        %v920 = vpop.permute.xlu0 %919
        %921 = vrot.lane.b32.xlu0 %v886, 32
        %v922 = vpop.permute.xlu0 %921
        %923 = vrot.lane.b32.xlu0 %v887, 32
        %v924 = vpop.permute.xlu0 %923
        %925 = vrot.lane.b32.xlu0 %v888, 32
        %v926 = vpop.permute.xlu0 %925
        %927 = vrot.lane.b32.xlu0 %v889, 32
        %v928 = vpop.permute.xlu0 %927
        %929 = vrot.lane.b32.xlu0 %v890, 32
        %v930 = vpop.permute.xlu0 %929
        %931 = vrot.lane.b32.xlu0 %v891, 32
        %v932 = vpop.permute.xlu0 %931
        %933 = vrot.lane.b32.xlu0 %v892, 32
        %v934 = vpop.permute.xlu0 %933
        %935 = vrot.lane.b32.xlu0 %v893, 32
        %v936 = vpop.permute.xlu0 %935
        %937 = vrot.lane.b32.xlu0 %v894, 32
        %v938 = vpop.permute.xlu0 %937
        %939 = vrot.lane.b32.xlu0 %v895, 32
        %v940 = vpop.permute.xlu0 %939
        %941 = vrot.lane.b32.xlu0 %v896, 32
        %v942 = vpop.permute.xlu0 %941
        %943 = vrot.lane.b32.xlu0 %v897, 32
        %v944 = vpop.permute.xlu0 %943
        %945 = vrot.lane.b32.xlu0 %v898, 32
        %v946 = vpop.permute.xlu0 %945
        %947 = vrot.lane.b32.xlu0 %v899, 32
        %v948 = vpop.permute.xlu0 %947
        %949 = vrot.lane.b32.xlu0 %v900, 32
        %v950 = vpop.permute.xlu0 %949
        %951 = vrot.lane.b32.xlu0 %v901, 32
        %v952 = vpop.permute.xlu0 %951
        %953 = vrot.lane.b32.xlu0 %v902, 32
        %v954 = vpop.permute.xlu0 %953
        %955 = vrot.lane.b32.xlu0 %v903, 32
        %v956 = vpop.permute.xlu0 %955
        %957 = vrot.lane.b32.xlu0 %v904, 32
        %v958 = vpop.permute.xlu0 %957
        %959 = vrot.lane.b32.xlu0 %v905, 32
        %v960 = vpop.permute.xlu0 %959
        %961 = vrot.lane.b32.xlu0 %v906, 32
        %v962 = vpop.permute.xlu0 %961
        %963 = vrot.lane.b32.xlu0 %v907, 32
        %v964 = vpop.permute.xlu0 %963
        %965 = vrot.lane.b32.xlu0 %v908, 32
        %v966 = vpop.permute.xlu0 %965
        %967 = vrot.lane.b32.xlu0 %v909, 32
        %v968 = vpop.permute.xlu0 %967
        %969 = vrot.lane.b32.xlu0 %v910, 32
        %v970 = vpop.permute.xlu0 %969
        %971 = vrot.lane.b32.xlu0 %v911, 32
        %v972 = vpop.permute.xlu0 %971
        %973 = vrot.lane.b32.xlu0 %v912, 32
        %v974 = vpop.permute.xlu0 %973
        %975 = vrot.lane.b32.xlu0 %v913, 32
        %v976 = vpop.permute.xlu0 %975
        %977 = vrot.lane.b32.xlu0 %v914, 32
        %v978 = vpop.permute.xlu0 %977
        %vm1011 = vcmask 388352
        %1012 = vst.msk [vmem:[#allocation3] sm:$0xf] %vm1011, %v916
        %1013 = vst.msk [vmem:[#allocation3 + $0x8] sm:$0xf] %vm1011, %v918
        %1014 = vst.msk [vmem:[#allocation3 + $0x10] sm:$0xf] %vm1011, %v920
        %1015 = vst.msk [vmem:[#allocation3 + $0x18] sm:$0xf] %vm1011, %v922
        %1016 = vst.msk [vmem:[#allocation3 + $0x20] sm:$0xf] %vm1011, %v924
        %1017 = vst.msk [vmem:[#allocation3 + $0x28] sm:$0xf] %vm1011, %v926
        %1018 = vst.msk [vmem:[#allocation3 + $0x30] sm:$0xf] %vm1011, %v928
        %1019 = vst.msk [vmem:[#allocation3 + $0x38] sm:$0xf] %vm1011, %v930
        %1020 = vst.msk [vmem:[#allocation3 + $0x40] sm:$0xf] %vm1011, %v932
        %1021 = vst.msk [vmem:[#allocation3 + $0x48] sm:$0xf] %vm1011, %v934
        %1022 = vst.msk [vmem:[#allocation3 + $0x50] sm:$0xf] %vm1011, %v936
        %1023 = vst.msk [vmem:[#allocation3 + $0x58] sm:$0xf] %vm1011, %v938
        %1024 = vst.msk [vmem:[#allocation3 + $0x60] sm:$0xf] %vm1011, %v940
        %1025 = vst.msk [vmem:[#allocation3 + $0x68] sm:$0xf] %vm1011, %v942
        %1026 = vst.msk [vmem:[#allocation3 + $0x70] sm:$0xf] %vm1011, %v944
        %1027 = vst.msk [vmem:[#allocation3 + $0x78] sm:$0xf] %vm1011, %v946
        %1028 = vst.msk [vmem:[#allocation3 + $0x80] sm:$0xf] %vm1011, %v948
        %1029 = vst.msk [vmem:[#allocation3 + $0x88] sm:$0xf] %vm1011, %v950
        %1030 = vst.msk [vmem:[#allocation3 + $0x90] sm:$0xf] %vm1011, %v952
        %1031 = vst.msk [vmem:[#allocation3 + $0x98] sm:$0xf] %vm1011, %v954
        %1032 = vst.msk [vmem:[#allocation3 + $0xa0] sm:$0xf] %vm1011, %v956
        %1033 = vst.msk [vmem:[#allocation3 + $0xa8] sm:$0xf] %vm1011, %v958
        %1034 = vst.msk [vmem:[#allocation3 + $0xb0] sm:$0xf] %vm1011, %v960
        %1035 = vst.msk [vmem:[#allocation3 + $0xb8] sm:$0xf] %vm1011, %v962
        %1036 = vst.msk [vmem:[#allocation3 + $0xc0] sm:$0xf] %vm1011, %v964
        %1037 = vst.msk [vmem:[#allocation3 + $0xc8] sm:$0xf] %vm1011, %v966
        %1038 = vst.msk [vmem:[#allocation3 + $0xd0] sm:$0xf] %vm1011, %v968
        %1039 = vst.msk [vmem:[#allocation3 + $0xd8] sm:$0xf] %vm1011, %v970
        %1040 = vst.msk [vmem:[#allocation3 + $0xe0] sm:$0xf] %vm1011, %v972
        %1041 = vst.msk [vmem:[#allocation3 + $0xe8] sm:$0xf] %vm1011, %v974
        %1042 = vst.msk [vmem:[#allocation3 + $0xf0] sm:$0xf] %vm1011, %v976
        %1043 = vst.msk [vmem:[#allocation3 + $0xf8] sm:$0xf] %vm1011, %v978
        %v1044 = vld [vmem:[%s304] sm:$0xff]
        %v1045 = vld [vmem:[%s304 + $0x8] sm:$0xff]
        %v1046 = vld [vmem:[%s304 + $0x18] sm:$0xff]
        %v1047 = vld [vmem:[%s304 + $0x20] sm:$0xff]
        %v1048 = vld [vmem:[%s304 + $0x30] sm:$0xff]
        %v1049 = vld [vmem:[%s304 + $0x38] sm:$0xff]
        %v1050 = vld [vmem:[%s304 + $0x48] sm:$0xff]
        %v1051 = vld [vmem:[%s304 + $0x50] sm:$0xff]
        %v1052 = vld [vmem:[%s304 + $0x60] sm:$0xff]
        %v1053 = vld [vmem:[%s304 + $0x68] sm:$0xff]
        %v1054 = vld [vmem:[%s304 + $0x78] sm:$0xff]
        %v1055 = vld [vmem:[%s304 + $0x80] sm:$0xff]
        %v1056 = vld [vmem:[%s304 + $0x90] sm:$0xff]
        %v1057 = vld [vmem:[%s304 + $0x98] sm:$0xff]
        %v1058 = vld [vmem:[%s304 + $0xa8] sm:$0xff]
        %v1059 = vld [vmem:[%s304 + $0xb0] sm:$0xff]
        %v1060 = vld [vmem:[%s304 + $0xc0] sm:$0xff]
        %v1061 = vld [vmem:[%s304 + $0xc8] sm:$0xff]
        %v1062 = vld [vmem:[%s304 + $0xd8] sm:$0xff]
        %v1063 = vld [vmem:[%s304 + $0xe0] sm:$0xff]
        %v1064 = vld [vmem:[%s304 + $0xf0] sm:$0xff]
        %v1065 = vld [vmem:[%s304 + $0xf8] sm:$0xff]
        %v1066 = vld [vmem:[%s304 + $0x108] sm:$0xff]
        %v1067 = vld [vmem:[%s304 + $0x110] sm:$0xff]
        %v1068 = vld [vmem:[%s304 + $0x120] sm:$0xff]
        %v1069 = vld [vmem:[%s304 + $0x128] sm:$0xff]
        %v1070 = vld [vmem:[%s304 + $0x138] sm:$0xff]
        %v1071 = vld [vmem:[%s304 + $0x140] sm:$0xff]
        %v1072 = vld [vmem:[%s304 + $0x150] sm:$0xff]
        %v1073 = vld [vmem:[%s304 + $0x158] sm:$0xff]
        %v1074 = vld [vmem:[%s304 + $0x168] sm:$0xff]
        %v1075 = vld [vmem:[%s304 + $0x170] sm:$0xff]
        %v1076 = vpack.c.bf16 %v1045, %v1044
        %v1077 = vpack.c.bf16 %v1047, %v1046
        %v1078 = vpack.c.bf16 %v1049, %v1048
        %v1079 = vpack.c.bf16 %v1051, %v1050
        %v1080 = vpack.c.bf16 %v1053, %v1052
        %v1081 = vpack.c.bf16 %v1055, %v1054
        %v1082 = vpack.c.bf16 %v1057, %v1056
        %v1083 = vpack.c.bf16 %v1059, %v1058
        %v1084 = vpack.c.bf16 %v1061, %v1060
        %v1085 = vpack.c.bf16 %v1063, %v1062
        %v1086 = vpack.c.bf16 %v1065, %v1064
        %v1087 = vpack.c.bf16 %v1067, %v1066
        %v1088 = vpack.c.bf16 %v1069, %v1068
        %v1089 = vpack.c.bf16 %v1071, %v1070
        %v1090 = vpack.c.bf16 %v1073, %v1072
        %v1091 = vpack.c.bf16 %v1075, %v1074
        %v1108 = vunpack.c.l.b16 %v1076
        %v1109 = vunpack.c.h.b16 %v1076
        %v1110 = vunpack.c.l.b16 %v1077
        %v1111 = vunpack.c.h.b16 %v1077
        %v1112 = vunpack.c.l.b16 %v1078
        %v1113 = vunpack.c.h.b16 %v1078
        %v1114 = vunpack.c.l.b16 %v1079
        %v1115 = vunpack.c.h.b16 %v1079
        %v1116 = vunpack.c.l.b16 %v1080
        %v1117 = vunpack.c.h.b16 %v1080
        %v1118 = vunpack.c.l.b16 %v1081
        %v1119 = vunpack.c.h.b16 %v1081
        %v1120 = vunpack.c.l.b16 %v1082
        %v1121 = vunpack.c.h.b16 %v1082
        %v1122 = vunpack.c.l.b16 %v1083
        %v1123 = vunpack.c.h.b16 %v1083
        %v1124 = vunpack.c.l.b16 %v1084
        %v1125 = vunpack.c.h.b16 %v1084
        %v1126 = vunpack.c.l.b16 %v1085
        %v1127 = vunpack.c.h.b16 %v1085
        %v1128 = vunpack.c.l.b16 %v1086
        %v1129 = vunpack.c.h.b16 %v1086
        %v1130 = vunpack.c.l.b16 %v1087
        %v1131 = vunpack.c.h.b16 %v1087
        %v1132 = vunpack.c.l.b16 %v1088
        %v1133 = vunpack.c.h.b16 %v1088
        %v1134 = vunpack.c.l.b16 %v1089
        %v1135 = vunpack.c.h.b16 %v1089
        %v1136 = vunpack.c.l.b16 %v1090
        %v1137 = vunpack.c.h.b16 %v1090
        %v1138 = vunpack.c.l.b16 %v1091
        %v1139 = vunpack.c.h.b16 %v1091
        %v1140 = vpack.c.b16 %v1108, %v1108
        %v1141 = vpack.c.b16 %v1109, %v1109
        %v1142 = vpack.c.b16 %v1110, %v1110
        %v1143 = vpack.c.b16 %v1111, %v1111
        %v1144 = vpack.c.b16 %v1112, %v1112
        %v1145 = vpack.c.b16 %v1113, %v1113
        %v1146 = vpack.c.b16 %v1114, %v1114
        %v1147 = vpack.c.b16 %v1115, %v1115
        %v1148 = vpack.c.b16 %v1116, %v1116
        %v1149 = vpack.c.b16 %v1117, %v1117
        %v1150 = vpack.c.b16 %v1118, %v1118
        %v1151 = vpack.c.b16 %v1119, %v1119
        %v1152 = vpack.c.b16 %v1120, %v1120
        %v1153 = vpack.c.b16 %v1121, %v1121
        %v1154 = vpack.c.b16 %v1122, %v1122
        %v1155 = vpack.c.b16 %v1123, %v1123
        %v1156 = vpack.c.b16 %v1124, %v1124
        %v1157 = vpack.c.b16 %v1125, %v1125
        %v1158 = vpack.c.b16 %v1126, %v1126
        %v1159 = vpack.c.b16 %v1127, %v1127
        %v1160 = vpack.c.b16 %v1128, %v1128
        %v1161 = vpack.c.b16 %v1129, %v1129
        %v1162 = vpack.c.b16 %v1130, %v1130
        %v1163 = vpack.c.b16 %v1131, %v1131
        %v1164 = vpack.c.b16 %v1132, %v1132
        %v1165 = vpack.c.b16 %v1133, %v1133
        %v1166 = vpack.c.b16 %v1134, %v1134
        %v1167 = vpack.c.b16 %v1135, %v1135
        %v1168 = vpack.c.b16 %v1136, %v1136
        %v1169 = vpack.c.b16 %v1137, %v1137
        %v1170 = vpack.c.b16 %v1138, %v1138
        %v1171 = vpack.c.b16 %v1139, %v1139
        %1172 = vrot.lane.b32.xlu0 %v1140, 48
        %v1173 = vpop.permute.xlu0 %1172
        %1174 = vrot.lane.b32.xlu0 %v1141, 48
        %v1175 = vpop.permute.xlu0 %1174
        %1176 = vrot.lane.b32.xlu0 %v1142, 48
        %v1177 = vpop.permute.xlu0 %1176
        %1178 = vrot.lane.b32.xlu0 %v1143, 48
        %v1179 = vpop.permute.xlu0 %1178
        %1180 = vrot.lane.b32.xlu0 %v1144, 48
        %v1181 = vpop.permute.xlu0 %1180
        %1182 = vrot.lane.b32.xlu0 %v1145, 48
        %v1183 = vpop.permute.xlu0 %1182
        %1184 = vrot.lane.b32.xlu0 %v1146, 48
        %v1185 = vpop.permute.xlu0 %1184
        %1186 = vrot.lane.b32.xlu0 %v1147, 48
        %v1187 = vpop.permute.xlu0 %1186
        %1188 = vrot.lane.b32.xlu0 %v1148, 48
        %v1189 = vpop.permute.xlu0 %1188
        %1190 = vrot.lane.b32.xlu0 %v1149, 48
        %v1191 = vpop.permute.xlu0 %1190
        %1192 = vrot.lane.b32.xlu0 %v1150, 48
        %v1193 = vpop.permute.xlu0 %1192
        %1194 = vrot.lane.b32.xlu0 %v1151, 48
        %v1195 = vpop.permute.xlu0 %1194
        %1196 = vrot.lane.b32.xlu0 %v1152, 48
        %v1197 = vpop.permute.xlu0 %1196
        %1198 = vrot.lane.b32.xlu0 %v1153, 48
        %v1199 = vpop.permute.xlu0 %1198
        %1200 = vrot.lane.b32.xlu0 %v1154, 48
        %v1201 = vpop.permute.xlu0 %1200
        %1202 = vrot.lane.b32.xlu0 %v1155, 48
        %v1203 = vpop.permute.xlu0 %1202
        %1204 = vrot.lane.b32.xlu0 %v1156, 48
        %v1205 = vpop.permute.xlu0 %1204
        %1206 = vrot.lane.b32.xlu0 %v1157, 48
        %v1207 = vpop.permute.xlu0 %1206
        %1208 = vrot.lane.b32.xlu0 %v1158, 48
        %v1209 = vpop.permute.xlu0 %1208
        %1210 = vrot.lane.b32.xlu0 %v1159, 48
        %v1211 = vpop.permute.xlu0 %1210
        %1212 = vrot.lane.b32.xlu0 %v1160, 48
        %v1213 = vpop.permute.xlu0 %1212
        %1214 = vrot.lane.b32.xlu0 %v1161, 48
        %v1215 = vpop.permute.xlu0 %1214
        %1216 = vrot.lane.b32.xlu0 %v1162, 48
        %v1217 = vpop.permute.xlu0 %1216
        %1218 = vrot.lane.b32.xlu0 %v1163, 48
        %v1219 = vpop.permute.xlu0 %1218
        %1220 = vrot.lane.b32.xlu0 %v1164, 48
        %v1221 = vpop.permute.xlu0 %1220
        %1222 = vrot.lane.b32.xlu0 %v1165, 48
        %v1223 = vpop.permute.xlu0 %1222
        %1224 = vrot.lane.b32.xlu0 %v1166, 48
        %v1225 = vpop.permute.xlu0 %1224
        %1226 = vrot.lane.b32.xlu0 %v1167, 48
        %v1227 = vpop.permute.xlu0 %1226
        %1228 = vrot.lane.b32.xlu0 %v1168, 48
        %v1229 = vpop.permute.xlu0 %1228
        %1230 = vrot.lane.b32.xlu0 %v1169, 48
        %v1231 = vpop.permute.xlu0 %1230
        %1232 = vrot.lane.b32.xlu0 %v1170, 48
        %v1233 = vpop.permute.xlu0 %1232
        %1234 = vrot.lane.b32.xlu0 %v1171, 48
        %v1235 = vpop.permute.xlu0 %1234
        %vm1268 = vcmask 519552
        %1269 = vst.msk [vmem:[#allocation3] sm:$0xf] %vm1268, %v1173
        %1270 = vst.msk [vmem:[#allocation3 + $0x8] sm:$0xf] %vm1268, %v1175
        %1271 = vst.msk [vmem:[#allocation3 + $0x10] sm:$0xf] %vm1268, %v1177
        %1272 = vst.msk [vmem:[#allocation3 + $0x18] sm:$0xf] %vm1268, %v1179
        %1273 = vst.msk [vmem:[#allocation3 + $0x20] sm:$0xf] %vm1268, %v1181
        %1274 = vst.msk [vmem:[#allocation3 + $0x28] sm:$0xf] %vm1268, %v1183
        %1275 = vst.msk [vmem:[#allocation3 + $0x30] sm:$0xf] %vm1268, %v1185
        %1276 = vst.msk [vmem:[#allocation3 + $0x38] sm:$0xf] %vm1268, %v1187
        %1277 = vst.msk [vmem:[#allocation3 + $0x40] sm:$0xf] %vm1268, %v1189
        %1278 = vst.msk [vmem:[#allocation3 + $0x48] sm:$0xf] %vm1268, %v1191
        %1279 = vst.msk [vmem:[#allocation3 + $0x50] sm:$0xf] %vm1268, %v1193
        %1280 = vst.msk [vmem:[#allocation3 + $0x58] sm:$0xf] %vm1268, %v1195
        %1281 = vst.msk [vmem:[#allocation3 + $0x60] sm:$0xf] %vm1268, %v1197
        %1282 = vst.msk [vmem:[#allocation3 + $0x68] sm:$0xf] %vm1268, %v1199
        %1283 = vst.msk [vmem:[#allocation3 + $0x70] sm:$0xf] %vm1268, %v1201
        %1284 = vst.msk [vmem:[#allocation3 + $0x78] sm:$0xf] %vm1268, %v1203
        %1285 = vst.msk [vmem:[#allocation3 + $0x80] sm:$0xf] %vm1268, %v1205
        %1286 = vst.msk [vmem:[#allocation3 + $0x88] sm:$0xf] %vm1268, %v1207
        %1287 = vst.msk [vmem:[#allocation3 + $0x90] sm:$0xf] %vm1268, %v1209
        %1288 = vst.msk [vmem:[#allocation3 + $0x98] sm:$0xf] %vm1268, %v1211
        %1289 = vst.msk [vmem:[#allocation3 + $0xa0] sm:$0xf] %vm1268, %v1213
        %1290 = vst.msk [vmem:[#allocation3 + $0xa8] sm:$0xf] %vm1268, %v1215
        %1291 = vst.msk [vmem:[#allocation3 + $0xb0] sm:$0xf] %vm1268, %v1217
        %1292 = vst.msk [vmem:[#allocation3 + $0xb8] sm:$0xf] %vm1268, %v1219
        %1293 = vst.msk [vmem:[#allocation3 + $0xc0] sm:$0xf] %vm1268, %v1221
        %1294 = vst.msk [vmem:[#allocation3 + $0xc8] sm:$0xf] %vm1268, %v1223
        %1295 = vst.msk [vmem:[#allocation3 + $0xd0] sm:$0xf] %vm1268, %v1225
        %1296 = vst.msk [vmem:[#allocation3 + $0xd8] sm:$0xf] %vm1268, %v1227
        %1297 = vst.msk [vmem:[#allocation3 + $0xe0] sm:$0xf] %vm1268, %v1229
        %1298 = vst.msk [vmem:[#allocation3 + $0xe8] sm:$0xf] %vm1268, %v1231
        %1299 = vst.msk [vmem:[#allocation3 + $0xf0] sm:$0xf] %vm1268, %v1233
        %1300 = vst.msk [vmem:[#allocation3 + $0xf8] sm:$0xf] %vm1268, %v1235
        %v1301 = vld [vmem:[%s304 + $0x1] sm:$0xff]
        %v1302 = vld [vmem:[%s304 + $0x9] sm:$0xff]
        %v1303 = vld [vmem:[%s304 + $0x19] sm:$0xff]
        %v1304 = vld [vmem:[%s304 + $0x21] sm:$0xff]
        %v1305 = vld [vmem:[%s304 + $0x31] sm:$0xff]
        %v1306 = vld [vmem:[%s304 + $0x39] sm:$0xff]
        %v1307 = vld [vmem:[%s304 + $0x49] sm:$0xff]
        %v1308 = vld [vmem:[%s304 + $0x51] sm:$0xff]
        %v1309 = vld [vmem:[%s304 + $0x61] sm:$0xff]
        %v1310 = vld [vmem:[%s304 + $0x69] sm:$0xff]
        %v1311 = vld [vmem:[%s304 + $0x79] sm:$0xff]
        %v1312 = vld [vmem:[%s304 + $0x81] sm:$0xff]
        %v1313 = vld [vmem:[%s304 + $0x91] sm:$0xff]
        %v1314 = vld [vmem:[%s304 + $0x99] sm:$0xff]
        %v1315 = vld [vmem:[%s304 + $0xa9] sm:$0xff]
        %v1316 = vld [vmem:[%s304 + $0xb1] sm:$0xff]
        %v1317 = vld [vmem:[%s304 + $0xc1] sm:$0xff]
        %v1318 = vld [vmem:[%s304 + $0xc9] sm:$0xff]
        %v1319 = vld [vmem:[%s304 + $0xd9] sm:$0xff]
        %v1320 = vld [vmem:[%s304 + $0xe1] sm:$0xff]
        %v1321 = vld [vmem:[%s304 + $0xf1] sm:$0xff]
        %v1322 = vld [vmem:[%s304 + $0xf9] sm:$0xff]
        %v1323 = vld [vmem:[%s304 + $0x109] sm:$0xff]
        %v1324 = vld [vmem:[%s304 + $0x111] sm:$0xff]
        %v1325 = vld [vmem:[%s304 + $0x121] sm:$0xff]
        %v1326 = vld [vmem:[%s304 + $0x129] sm:$0xff]
        %v1327 = vld [vmem:[%s304 + $0x139] sm:$0xff]
        %v1328 = vld [vmem:[%s304 + $0x141] sm:$0xff]
        %v1329 = vld [vmem:[%s304 + $0x151] sm:$0xff]
        %v1330 = vld [vmem:[%s304 + $0x159] sm:$0xff]
        %v1331 = vld [vmem:[%s304 + $0x169] sm:$0xff]
        %v1332 = vld [vmem:[%s304 + $0x171] sm:$0xff]
        %v1333 = vpack.c.bf16 %v1302, %v1301
        %v1334 = vpack.c.bf16 %v1304, %v1303
        %v1335 = vpack.c.bf16 %v1306, %v1305
        %v1336 = vpack.c.bf16 %v1308, %v1307
        %v1337 = vpack.c.bf16 %v1310, %v1309
        %v1338 = vpack.c.bf16 %v1312, %v1311
        %v1339 = vpack.c.bf16 %v1314, %v1313
        %v1340 = vpack.c.bf16 %v1316, %v1315
        %v1341 = vpack.c.bf16 %v1318, %v1317
        %v1342 = vpack.c.bf16 %v1320, %v1319
        %v1343 = vpack.c.bf16 %v1322, %v1321
        %v1344 = vpack.c.bf16 %v1324, %v1323
        %v1345 = vpack.c.bf16 %v1326, %v1325
        %v1346 = vpack.c.bf16 %v1328, %v1327
        %v1347 = vpack.c.bf16 %v1330, %v1329
        %v1348 = vpack.c.bf16 %v1332, %v1331
        %v1365 = vunpack.c.l.b16 %v1333
        %v1366 = vunpack.c.h.b16 %v1333
        %v1367 = vunpack.c.l.b16 %v1334
        %v1368 = vunpack.c.h.b16 %v1334
        %v1369 = vunpack.c.l.b16 %v1335
        %v1370 = vunpack.c.h.b16 %v1335
        %v1371 = vunpack.c.l.b16 %v1336
        %v1372 = vunpack.c.h.b16 %v1336
        %v1373 = vunpack.c.l.b16 %v1337
        %v1374 = vunpack.c.h.b16 %v1337
        %v1375 = vunpack.c.l.b16 %v1338
        %v1376 = vunpack.c.h.b16 %v1338
        %v1377 = vunpack.c.l.b16 %v1339
        %v1378 = vunpack.c.h.b16 %v1339
        %v1379 = vunpack.c.l.b16 %v1340
        %v1380 = vunpack.c.h.b16 %v1340
        %v1381 = vunpack.c.l.b16 %v1341
        %v1382 = vunpack.c.h.b16 %v1341
        %v1383 = vunpack.c.l.b16 %v1342
        %v1384 = vunpack.c.h.b16 %v1342
        %v1385 = vunpack.c.l.b16 %v1343
        %v1386 = vunpack.c.h.b16 %v1343
        %v1387 = vunpack.c.l.b16 %v1344
        %v1388 = vunpack.c.h.b16 %v1344
        %v1389 = vunpack.c.l.b16 %v1345
        %v1390 = vunpack.c.h.b16 %v1345
        %v1391 = vunpack.c.l.b16 %v1346
        %v1392 = vunpack.c.h.b16 %v1346
        %v1393 = vunpack.c.l.b16 %v1347
        %v1394 = vunpack.c.h.b16 %v1347
        %v1395 = vunpack.c.l.b16 %v1348
        %v1396 = vunpack.c.h.b16 %v1348
        %v1397 = vpack.c.b16 %v1365, %v1365
        %v1398 = vpack.c.b16 %v1366, %v1366
        %v1399 = vpack.c.b16 %v1367, %v1367
        %v1400 = vpack.c.b16 %v1368, %v1368
        %v1401 = vpack.c.b16 %v1369, %v1369
        %v1402 = vpack.c.b16 %v1370, %v1370
        %v1403 = vpack.c.b16 %v1371, %v1371
        %v1404 = vpack.c.b16 %v1372, %v1372
        %v1405 = vpack.c.b16 %v1373, %v1373
        %v1406 = vpack.c.b16 %v1374, %v1374
        %v1407 = vpack.c.b16 %v1375, %v1375
        %v1408 = vpack.c.b16 %v1376, %v1376
        %v1409 = vpack.c.b16 %v1377, %v1377
        %v1410 = vpack.c.b16 %v1378, %v1378
        %v1411 = vpack.c.b16 %v1379, %v1379
        %v1412 = vpack.c.b16 %v1380, %v1380
        %v1413 = vpack.c.b16 %v1381, %v1381
        %v1414 = vpack.c.b16 %v1382, %v1382
        %v1415 = vpack.c.b16 %v1383, %v1383
        %v1416 = vpack.c.b16 %v1384, %v1384
        %v1417 = vpack.c.b16 %v1385, %v1385
        %v1418 = vpack.c.b16 %v1386, %v1386
        %v1419 = vpack.c.b16 %v1387, %v1387
        %v1420 = vpack.c.b16 %v1388, %v1388
        %v1421 = vpack.c.b16 %v1389, %v1389
        %v1422 = vpack.c.b16 %v1390, %v1390
        %v1423 = vpack.c.b16 %v1391, %v1391
        %v1424 = vpack.c.b16 %v1392, %v1392
        %v1425 = vpack.c.b16 %v1393, %v1393
        %v1426 = vpack.c.b16 %v1394, %v1394
        %v1427 = vpack.c.b16 %v1395, %v1395
        %v1428 = vpack.c.b16 %v1396, %v1396
        %1429 = vrot.lane.b32.xlu0 %v1397, 64
        %v1430 = vpop.permute.xlu0 %1429
        %1431 = vrot.lane.b32.xlu0 %v1398, 64
        %v1432 = vpop.permute.xlu0 %1431
        %1433 = vrot.lane.b32.xlu0 %v1399, 64
        %v1434 = vpop.permute.xlu0 %1433
        %1435 = vrot.lane.b32.xlu0 %v1400, 64
        %v1436 = vpop.permute.xlu0 %1435
        %1437 = vrot.lane.b32.xlu0 %v1401, 64
        %v1438 = vpop.permute.xlu0 %1437
        %1439 = vrot.lane.b32.xlu0 %v1402, 64
        %v1440 = vpop.permute.xlu0 %1439
        %1441 = vrot.lane.b32.xlu0 %v1403, 64
        %v1442 = vpop.permute.xlu0 %1441
        %1443 = vrot.lane.b32.xlu0 %v1404, 64
        %v1444 = vpop.permute.xlu0 %1443
        %1445 = vrot.lane.b32.xlu0 %v1405, 64
        %v1446 = vpop.permute.xlu0 %1445
        %1447 = vrot.lane.b32.xlu0 %v1406, 64
        %v1448 = vpop.permute.xlu0 %1447
        %1449 = vrot.lane.b32.xlu0 %v1407, 64
        %v1450 = vpop.permute.xlu0 %1449
        %1451 = vrot.lane.b32.xlu0 %v1408, 64
        %v1452 = vpop.permute.xlu0 %1451
        %1453 = vrot.lane.b32.xlu0 %v1409, 64
        %v1454 = vpop.permute.xlu0 %1453
        %1455 = vrot.lane.b32.xlu0 %v1410, 64
        %v1456 = vpop.permute.xlu0 %1455
        %1457 = vrot.lane.b32.xlu0 %v1411, 64
        %v1458 = vpop.permute.xlu0 %1457
        %1459 = vrot.lane.b32.xlu0 %v1412, 64
        %v1460 = vpop.permute.xlu0 %1459
        %1461 = vrot.lane.b32.xlu0 %v1413, 64
        %v1462 = vpop.permute.xlu0 %1461
        %1463 = vrot.lane.b32.xlu0 %v1414, 64
        %v1464 = vpop.permute.xlu0 %1463
        %1465 = vrot.lane.b32.xlu0 %v1415, 64
        %v1466 = vpop.permute.xlu0 %1465
        %1467 = vrot.lane.b32.xlu0 %v1416, 64
        %v1468 = vpop.permute.xlu0 %1467
        %1469 = vrot.lane.b32.xlu0 %v1417, 64
        %v1470 = vpop.permute.xlu0 %1469
        %1471 = vrot.lane.b32.xlu0 %v1418, 64
        %v1472 = vpop.permute.xlu0 %1471
        %1473 = vrot.lane.b32.xlu0 %v1419, 64
        %v1474 = vpop.permute.xlu0 %1473
        %1475 = vrot.lane.b32.xlu0 %v1420, 64
        %v1476 = vpop.permute.xlu0 %1475
        %1477 = vrot.lane.b32.xlu0 %v1421, 64
        %v1478 = vpop.permute.xlu0 %1477
        %1479 = vrot.lane.b32.xlu0 %v1422, 64
        %v1480 = vpop.permute.xlu0 %1479
        %1481 = vrot.lane.b32.xlu0 %v1423, 64
        %v1482 = vpop.permute.xlu0 %1481
        %1483 = vrot.lane.b32.xlu0 %v1424, 64
        %v1484 = vpop.permute.xlu0 %1483
        %1485 = vrot.lane.b32.xlu0 %v1425, 64
        %v1486 = vpop.permute.xlu0 %1485
        %1487 = vrot.lane.b32.xlu0 %v1426, 64
        %v1488 = vpop.permute.xlu0 %1487
        %1489 = vrot.lane.b32.xlu0 %v1427, 64
        %v1490 = vpop.permute.xlu0 %1489
        %1491 = vrot.lane.b32.xlu0 %v1428, 64
        %v1492 = vpop.permute.xlu0 %1491
        %vm1525 = vcmask 650752
        %1526 = vst.msk [vmem:[#allocation3] sm:$0xf] %vm1525, %v1430
        %1527 = vst.msk [vmem:[#allocation3 + $0x8] sm:$0xf] %vm1525, %v1432
        %1528 = vst.msk [vmem:[#allocation3 + $0x10] sm:$0xf] %vm1525, %v1434
        %1529 = vst.msk [vmem:[#allocation3 + $0x18] sm:$0xf] %vm1525, %v1436
        %1530 = vst.msk [vmem:[#allocation3 + $0x20] sm:$0xf] %vm1525, %v1438
        %1531 = vst.msk [vmem:[#allocation3 + $0x28] sm:$0xf] %vm1525, %v1440
        %1532 = vst.msk [vmem:[#allocation3 + $0x30] sm:$0xf] %vm1525, %v1442
        %1533 = vst.msk [vmem:[#allocation3 + $0x38] sm:$0xf] %vm1525, %v1444
        %1534 = vst.msk [vmem:[#allocation3 + $0x40] sm:$0xf] %vm1525, %v1446
        %1535 = vst.msk [vmem:[#allocation3 + $0x48] sm:$0xf] %vm1525, %v1448
        %1536 = vst.msk [vmem:[#allocation3 + $0x50] sm:$0xf] %vm1525, %v1450
        %1537 = vst.msk [vmem:[#allocation3 + $0x58] sm:$0xf] %vm1525, %v1452
        %1538 = vst.msk [vmem:[#allocation3 + $0x60] sm:$0xf] %vm1525, %v1454
        %1539 = vst.msk [vmem:[#allocation3 + $0x68] sm:$0xf] %vm1525, %v1456
        %1540 = vst.msk [vmem:[#allocation3 + $0x70] sm:$0xf] %vm1525, %v1458
        %1541 = vst.msk [vmem:[#allocation3 + $0x78] sm:$0xf] %vm1525, %v1460
        %1542 = vst.msk [vmem:[#allocation3 + $0x80] sm:$0xf] %vm1525, %v1462
        %1543 = vst.msk [vmem:[#allocation3 + $0x88] sm:$0xf] %vm1525, %v1464
        %1544 = vst.msk [vmem:[#allocation3 + $0x90] sm:$0xf] %vm1525, %v1466
        %1545 = vst.msk [vmem:[#allocation3 + $0x98] sm:$0xf] %vm1525, %v1468
        %1546 = vst.msk [vmem:[#allocation3 + $0xa0] sm:$0xf] %vm1525, %v1470
        %1547 = vst.msk [vmem:[#allocation3 + $0xa8] sm:$0xf] %vm1525, %v1472
        %1548 = vst.msk [vmem:[#allocation3 + $0xb0] sm:$0xf] %vm1525, %v1474
        %1549 = vst.msk [vmem:[#allocation3 + $0xb8] sm:$0xf] %vm1525, %v1476
        %1550 = vst.msk [vmem:[#allocation3 + $0xc0] sm:$0xf] %vm1525, %v1478
        %1551 = vst.msk [vmem:[#allocation3 + $0xc8] sm:$0xf] %vm1525, %v1480
        %1552 = vst.msk [vmem:[#allocation3 + $0xd0] sm:$0xf] %vm1525, %v1482
        %1553 = vst.msk [vmem:[#allocation3 + $0xd8] sm:$0xf] %vm1525, %v1484
        %1554 = vst.msk [vmem:[#allocation3 + $0xe0] sm:$0xf] %vm1525, %v1486
        %1555 = vst.msk [vmem:[#allocation3 + $0xe8] sm:$0xf] %vm1525, %v1488
        %1556 = vst.msk [vmem:[#allocation3 + $0xf0] sm:$0xf] %vm1525, %v1490
        %1557 = vst.msk [vmem:[#allocation3 + $0xf8] sm:$0xf] %vm1525, %v1492
        %v1558 = vld [vmem:[%s304 + $0x2] sm:$0xff]
        %v1559 = vld [vmem:[%s304 + $0xa] sm:$0xff]
        %v1560 = vld [vmem:[%s304 + $0x1a] sm:$0xff]
        %v1561 = vld [vmem:[%s304 + $0x22] sm:$0xff]
        %v1562 = vld [vmem:[%s304 + $0x32] sm:$0xff]
        %v1563 = vld [vmem:[%s304 + $0x3a] sm:$0xff]
        %v1564 = vld [vmem:[%s304 + $0x4a] sm:$0xff]
        %v1565 = vld [vmem:[%s304 + $0x52] sm:$0xff]
        %v1566 = vld [vmem:[%s304 + $0x62] sm:$0xff]
        %v1567 = vld [vmem:[%s304 + $0x6a] sm:$0xff]
        %v1568 = vld [vmem:[%s304 + $0x7a] sm:$0xff]
        %v1569 = vld [vmem:[%s304 + $0x82] sm:$0xff]
        %v1570 = vld [vmem:[%s304 + $0x92] sm:$0xff]
        %v1571 = vld [vmem:[%s304 + $0x9a] sm:$0xff]
        %v1572 = vld [vmem:[%s304 + $0xaa] sm:$0xff]
        %v1573 = vld [vmem:[%s304 + $0xb2] sm:$0xff]
        %v1574 = vld [vmem:[%s304 + $0xc2] sm:$0xff]
        %v1575 = vld [vmem:[%s304 + $0xca] sm:$0xff]
        %v1576 = vld [vmem:[%s304 + $0xda] sm:$0xff]
        %v1577 = vld [vmem:[%s304 + $0xe2] sm:$0xff]
        %v1578 = vld [vmem:[%s304 + $0xf2] sm:$0xff]
        %v1579 = vld [vmem:[%s304 + $0xfa] sm:$0xff]
        %v1580 = vld [vmem:[%s304 + $0x10a] sm:$0xff]
        %v1581 = vld [vmem:[%s304 + $0x112] sm:$0xff]
        %v1582 = vld [vmem:[%s304 + $0x122] sm:$0xff]
        %v1583 = vld [vmem:[%s304 + $0x12a] sm:$0xff]
        %v1584 = vld [vmem:[%s304 + $0x13a] sm:$0xff]
        %v1585 = vld [vmem:[%s304 + $0x142] sm:$0xff]
        %v1586 = vld [vmem:[%s304 + $0x152] sm:$0xff]
        %v1587 = vld [vmem:[%s304 + $0x15a] sm:$0xff]
        %v1588 = vld [vmem:[%s304 + $0x16a] sm:$0xff]
        %v1589 = vld [vmem:[%s304 + $0x172] sm:$0xff]
        %v1590 = vpack.c.bf16 %v1559, %v1558
        %v1591 = vpack.c.bf16 %v1561, %v1560
        %v1592 = vpack.c.bf16 %v1563, %v1562
        %v1593 = vpack.c.bf16 %v1565, %v1564
        %v1594 = vpack.c.bf16 %v1567, %v1566
        %v1595 = vpack.c.bf16 %v1569, %v1568
        %v1596 = vpack.c.bf16 %v1571, %v1570
        %v1597 = vpack.c.bf16 %v1573, %v1572
        %v1598 = vpack.c.bf16 %v1575, %v1574
        %v1599 = vpack.c.bf16 %v1577, %v1576
        %v1600 = vpack.c.bf16 %v1579, %v1578
        %v1601 = vpack.c.bf16 %v1581, %v1580
        %v1602 = vpack.c.bf16 %v1583, %v1582
        %v1603 = vpack.c.bf16 %v1585, %v1584
        %v1604 = vpack.c.bf16 %v1587, %v1586
        %v1605 = vpack.c.bf16 %v1589, %v1588
        %v1622 = vunpack.c.l.b16 %v1590
        %v1623 = vunpack.c.h.b16 %v1590
        %v1624 = vunpack.c.l.b16 %v1591
        %v1625 = vunpack.c.h.b16 %v1591
        %v1626 = vunpack.c.l.b16 %v1592
        %v1627 = vunpack.c.h.b16 %v1592
        %v1628 = vunpack.c.l.b16 %v1593
        %v1629 = vunpack.c.h.b16 %v1593
        %v1630 = vunpack.c.l.b16 %v1594
        %v1631 = vunpack.c.h.b16 %v1594
        %v1632 = vunpack.c.l.b16 %v1595
        %v1633 = vunpack.c.h.b16 %v1595
        %v1634 = vunpack.c.l.b16 %v1596
        %v1635 = vunpack.c.h.b16 %v1596
        %v1636 = vunpack.c.l.b16 %v1597
        %v1637 = vunpack.c.h.b16 %v1597
        %v1638 = vunpack.c.l.b16 %v1598
        %v1639 = vunpack.c.h.b16 %v1598
        %v1640 = vunpack.c.l.b16 %v1599
        %v1641 = vunpack.c.h.b16 %v1599
        %v1642 = vunpack.c.l.b16 %v1600
        %v1643 = vunpack.c.h.b16 %v1600
        %v1644 = vunpack.c.l.b16 %v1601
        %v1645 = vunpack.c.h.b16 %v1601
        %v1646 = vunpack.c.l.b16 %v1602
        %v1647 = vunpack.c.h.b16 %v1602
        %v1648 = vunpack.c.l.b16 %v1603
        %v1649 = vunpack.c.h.b16 %v1603
        %v1650 = vunpack.c.l.b16 %v1604
        %v1651 = vunpack.c.h.b16 %v1604
        %v1652 = vunpack.c.l.b16 %v1605
        %v1653 = vunpack.c.h.b16 %v1605
        %v1654 = vpack.c.b16 %v1622, %v1622
        %v1655 = vpack.c.b16 %v1623, %v1623
        %v1656 = vpack.c.b16 %v1624, %v1624
        %v1657 = vpack.c.b16 %v1625, %v1625
        %v1658 = vpack.c.b16 %v1626, %v1626
        %v1659 = vpack.c.b16 %v1627, %v1627
        %v1660 = vpack.c.b16 %v1628, %v1628
        %v1661 = vpack.c.b16 %v1629, %v1629
        %v1662 = vpack.c.b16 %v1630, %v1630
        %v1663 = vpack.c.b16 %v1631, %v1631
        %v1664 = vpack.c.b16 %v1632, %v1632
        %v1665 = vpack.c.b16 %v1633, %v1633
        %v1666 = vpack.c.b16 %v1634, %v1634
        %v1667 = vpack.c.b16 %v1635, %v1635
        %v1668 = vpack.c.b16 %v1636, %v1636
        %v1669 = vpack.c.b16 %v1637, %v1637
        %v1670 = vpack.c.b16 %v1638, %v1638
        %v1671 = vpack.c.b16 %v1639, %v1639
        %v1672 = vpack.c.b16 %v1640, %v1640
        %v1673 = vpack.c.b16 %v1641, %v1641
        %v1674 = vpack.c.b16 %v1642, %v1642
        %v1675 = vpack.c.b16 %v1643, %v1643
        %v1676 = vpack.c.b16 %v1644, %v1644
        %v1677 = vpack.c.b16 %v1645, %v1645
        %v1678 = vpack.c.b16 %v1646, %v1646
        %v1679 = vpack.c.b16 %v1647, %v1647
        %v1680 = vpack.c.b16 %v1648, %v1648
        %v1681 = vpack.c.b16 %v1649, %v1649
        %v1682 = vpack.c.b16 %v1650, %v1650
        %v1683 = vpack.c.b16 %v1651, %v1651
        %v1684 = vpack.c.b16 %v1652, %v1652
        %v1685 = vpack.c.b16 %v1653, %v1653
        %1686 = vrot.lane.b32.xlu0 %v1654, 80
        %v1687 = vpop.permute.xlu0 %1686
        %1688 = vrot.lane.b32.xlu0 %v1655, 80
        %v1689 = vpop.permute.xlu0 %1688
        %1690 = vrot.lane.b32.xlu0 %v1656, 80
        %v1691 = vpop.permute.xlu0 %1690
        %1692 = vrot.lane.b32.xlu0 %v1657, 80
        %v1693 = vpop.permute.xlu0 %1692
        %1694 = vrot.lane.b32.xlu0 %v1658, 80
        %v1695 = vpop.permute.xlu0 %1694
        %1696 = vrot.lane.b32.xlu0 %v1659, 80
        %v1697 = vpop.permute.xlu0 %1696
        %1698 = vrot.lane.b32.xlu0 %v1660, 80
        %v1699 = vpop.permute.xlu0 %1698
        %1700 = vrot.lane.b32.xlu0 %v1661, 80
        %v1701 = vpop.permute.xlu0 %1700
        %1702 = vrot.lane.b32.xlu0 %v1662, 80
        %v1703 = vpop.permute.xlu0 %1702
        %1704 = vrot.lane.b32.xlu0 %v1663, 80
        %v1705 = vpop.permute.xlu0 %1704
        %1706 = vrot.lane.b32.xlu0 %v1664, 80
        %v1707 = vpop.permute.xlu0 %1706
        %1708 = vrot.lane.b32.xlu0 %v1665, 80
        %v1709 = vpop.permute.xlu0 %1708
        %1710 = vrot.lane.b32.xlu0 %v1666, 80
        %v1711 = vpop.permute.xlu0 %1710
        %1712 = vrot.lane.b32.xlu0 %v1667, 80
        %v1713 = vpop.permute.xlu0 %1712
        %1714 = vrot.lane.b32.xlu0 %v1668, 80
        %v1715 = vpop.permute.xlu0 %1714
        %1716 = vrot.lane.b32.xlu0 %v1669, 80
        %v1717 = vpop.permute.xlu0 %1716
        %1718 = vrot.lane.b32.xlu0 %v1670, 80
        %v1719 = vpop.permute.xlu0 %1718
        %1720 = vrot.lane.b32.xlu0 %v1671, 80
        %v1721 = vpop.permute.xlu0 %1720
        %1722 = vrot.lane.b32.xlu0 %v1672, 80
        %v1723 = vpop.permute.xlu0 %1722
        %1724 = vrot.lane.b32.xlu0 %v1673, 80
        %v1725 = vpop.permute.xlu0 %1724
        %1726 = vrot.lane.b32.xlu0 %v1674, 80
        %v1727 = vpop.permute.xlu0 %1726
        %1728 = vrot.lane.b32.xlu0 %v1675, 80
        %v1729 = vpop.permute.xlu0 %1728
        %1730 = vrot.lane.b32.xlu0 %v1676, 80
        %v1731 = vpop.permute.xlu0 %1730
        %1732 = vrot.lane.b32.xlu0 %v1677, 80
        %v1733 = vpop.permute.xlu0 %1732
        %1734 = vrot.lane.b32.xlu0 %v1678, 80
        %v1735 = vpop.permute.xlu0 %1734
        %1736 = vrot.lane.b32.xlu0 %v1679, 80
        %v1737 = vpop.permute.xlu0 %1736
        %1738 = vrot.lane.b32.xlu0 %v1680, 80
        %v1739 = vpop.permute.xlu0 %1738
        %1740 = vrot.lane.b32.xlu0 %v1681, 80
        %v1741 = vpop.permute.xlu0 %1740
        %1742 = vrot.lane.b32.xlu0 %v1682, 80
        %v1743 = vpop.permute.xlu0 %1742
        %1744 = vrot.lane.b32.xlu0 %v1683, 80
        %v1745 = vpop.permute.xlu0 %1744
        %1746 = vrot.lane.b32.xlu0 %v1684, 80
        %v1747 = vpop.permute.xlu0 %1746
        %1748 = vrot.lane.b32.xlu0 %v1685, 80
        %v1749 = vpop.permute.xlu0 %1748
        %vm1782 = vcmask 781952
        %1783 = vst.msk [vmem:[#allocation3] sm:$0xf] %vm1782, %v1687
        %1784 = vst.msk [vmem:[#allocation3 + $0x8] sm:$0xf] %vm1782, %v1689
        %1785 = vst.msk [vmem:[#allocation3 + $0x10] sm:$0xf] %vm1782, %v1691
        %1786 = vst.msk [vmem:[#allocation3 + $0x18] sm:$0xf] %vm1782, %v1693
        %1787 = vst.msk [vmem:[#allocation3 + $0x20] sm:$0xf] %vm1782, %v1695
        %1788 = vst.msk [vmem:[#allocation3 + $0x28] sm:$0xf] %vm1782, %v1697
        %1789 = vst.msk [vmem:[#allocation3 + $0x30] sm:$0xf] %vm1782, %v1699
        %1790 = vst.msk [vmem:[#allocation3 + $0x38] sm:$0xf] %vm1782, %v1701
        %1791 = vst.msk [vmem:[#allocation3 + $0x40] sm:$0xf] %vm1782, %v1703
        %1792 = vst.msk [vmem:[#allocation3 + $0x48] sm:$0xf] %vm1782, %v1705
        %1793 = vst.msk [vmem:[#allocation3 + $0x50] sm:$0xf] %vm1782, %v1707
        %1794 = vst.msk [vmem:[#allocation3 + $0x58] sm:$0xf] %vm1782, %v1709
        %1795 = vst.msk [vmem:[#allocation3 + $0x60] sm:$0xf] %vm1782, %v1711
        %1796 = vst.msk [vmem:[#allocation3 + $0x68] sm:$0xf] %vm1782, %v1713
        %1797 = vst.msk [vmem:[#allocation3 + $0x70] sm:$0xf] %vm1782, %v1715
        %1798 = vst.msk [vmem:[#allocation3 + $0x78] sm:$0xf] %vm1782, %v1717
        %1799 = vst.msk [vmem:[#allocation3 + $0x80] sm:$0xf] %vm1782, %v1719
        %1800 = vst.msk [vmem:[#allocation3 + $0x88] sm:$0xf] %vm1782, %v1721
        %1801 = vst.msk [vmem:[#allocation3 + $0x90] sm:$0xf] %vm1782, %v1723
        %1802 = vst.msk [vmem:[#allocation3 + $0x98] sm:$0xf] %vm1782, %v1725
        %1803 = vst.msk [vmem:[#allocation3 + $0xa0] sm:$0xf] %vm1782, %v1727
        %1804 = vst.msk [vmem:[#allocation3 + $0xa8] sm:$0xf] %vm1782, %v1729
        %1805 = vst.msk [vmem:[#allocation3 + $0xb0] sm:$0xf] %vm1782, %v1731
        %1806 = vst.msk [vmem:[#allocation3 + $0xb8] sm:$0xf] %vm1782, %v1733
        %1807 = vst.msk [vmem:[#allocation3 + $0xc0] sm:$0xf] %vm1782, %v1735
        %1808 = vst.msk [vmem:[#allocation3 + $0xc8] sm:$0xf] %vm1782, %v1737
        %1809 = vst.msk [vmem:[#allocation3 + $0xd0] sm:$0xf] %vm1782, %v1739
        %1810 = vst.msk [vmem:[#allocation3 + $0xd8] sm:$0xf] %vm1782, %v1741
        %1811 = vst.msk [vmem:[#allocation3 + $0xe0] sm:$0xf] %vm1782, %v1743
        %1812 = vst.msk [vmem:[#allocation3 + $0xe8] sm:$0xf] %vm1782, %v1745
        %1813 = vst.msk [vmem:[#allocation3 + $0xf0] sm:$0xf] %vm1782, %v1747
        %1814 = vst.msk [vmem:[#allocation3 + $0xf8] sm:$0xf] %vm1782, %v1749
        %s1815 = scalar_lea.vmem [#allocation2], 48
        %v1816 = vld [vmem:[%s1815] sm:$0xff]
        %v1817 = vld [vmem:[%s1815 + $0x8] sm:$0xff]
        %v1818 = vld [vmem:[%s1815 + $0x18] sm:$0xff]
        %v1819 = vld [vmem:[%s1815 + $0x20] sm:$0xff]
        %v1820 = vld [vmem:[%s1815 + $0x30] sm:$0xff]
        %v1821 = vld [vmem:[%s1815 + $0x38] sm:$0xff]
        %v1822 = vld [vmem:[%s1815 + $0x48] sm:$0xff]
        %v1823 = vld [vmem:[%s1815 + $0x50] sm:$0xff]
        %v1824 = vld [vmem:[%s1815 + $0x60] sm:$0xff]
        %v1825 = vld [vmem:[%s1815 + $0x68] sm:$0xff]
        %v1826 = vld [vmem:[%s1815 + $0x78] sm:$0xff]
        %v1827 = vld [vmem:[%s1815 + $0x80] sm:$0xff]
        %v1828 = vld [vmem:[%s1815 + $0x90] sm:$0xff]
        %v1829 = vld [vmem:[%s1815 + $0x98] sm:$0xff]
        %v1830 = vld [vmem:[%s1815 + $0xa8] sm:$0xff]
        %v1831 = vld [vmem:[%s1815 + $0xb0] sm:$0xff]
        %v1832 = vld [vmem:[%s1815 + $0xc0] sm:$0xff]
        %v1833 = vld [vmem:[%s1815 + $0xc8] sm:$0xff]
        %v1834 = vld [vmem:[%s1815 + $0xd8] sm:$0xff]
        %v1835 = vld [vmem:[%s1815 + $0xe0] sm:$0xff]
        %v1836 = vld [vmem:[%s1815 + $0xf0] sm:$0xff]
        %v1837 = vld [vmem:[%s1815 + $0xf8] sm:$0xff]
        %v1838 = vld [vmem:[%s1815 + $0x108] sm:$0xff]
        %v1839 = vld [vmem:[%s1815 + $0x110] sm:$0xff]
        %v1840 = vld [vmem:[%s1815 + $0x120] sm:$0xff]
        %v1841 = vld [vmem:[%s1815 + $0x128] sm:$0xff]
        %v1842 = vld [vmem:[%s1815 + $0x138] sm:$0xff]
        %v1843 = vld [vmem:[%s1815 + $0x140] sm:$0xff]
        %v1844 = vld [vmem:[%s1815 + $0x150] sm:$0xff]
        %v1845 = vld [vmem:[%s1815 + $0x158] sm:$0xff]
        %v1846 = vld [vmem:[%s1815 + $0x168] sm:$0xff]
        %v1847 = vld [vmem:[%s1815 + $0x170] sm:$0xff]
        %v1848 = vpack.c.bf16 %v1817, %v1816
        %v1849 = vpack.c.bf16 %v1819, %v1818
        %v1850 = vpack.c.bf16 %v1821, %v1820
        %v1851 = vpack.c.bf16 %v1823, %v1822
        %v1852 = vpack.c.bf16 %v1825, %v1824
        %v1853 = vpack.c.bf16 %v1827, %v1826
        %v1854 = vpack.c.bf16 %v1829, %v1828
        %v1855 = vpack.c.bf16 %v1831, %v1830
        %v1856 = vpack.c.bf16 %v1833, %v1832
        %v1857 = vpack.c.bf16 %v1835, %v1834
        %v1858 = vpack.c.bf16 %v1837, %v1836
        %v1859 = vpack.c.bf16 %v1839, %v1838
        %v1860 = vpack.c.bf16 %v1841, %v1840
        %v1861 = vpack.c.bf16 %v1843, %v1842
        %v1862 = vpack.c.bf16 %v1845, %v1844
        %v1863 = vpack.c.bf16 %v1847, %v1846
        %v1880 = vunpack.c.l.b16 %v1848
        %v1881 = vunpack.c.h.b16 %v1848
        %v1882 = vunpack.c.l.b16 %v1849
        %v1883 = vunpack.c.h.b16 %v1849
        %v1884 = vunpack.c.l.b16 %v1850
        %v1885 = vunpack.c.h.b16 %v1850
        %v1886 = vunpack.c.l.b16 %v1851
        %v1887 = vunpack.c.h.b16 %v1851
        %v1888 = vunpack.c.l.b16 %v1852
        %v1889 = vunpack.c.h.b16 %v1852
        %v1890 = vunpack.c.l.b16 %v1853
        %v1891 = vunpack.c.h.b16 %v1853
        %v1892 = vunpack.c.l.b16 %v1854
        %v1893 = vunpack.c.h.b16 %v1854
        %v1894 = vunpack.c.l.b16 %v1855
        %v1895 = vunpack.c.h.b16 %v1855
        %v1896 = vunpack.c.l.b16 %v1856
        %v1897 = vunpack.c.h.b16 %v1856
        %v1898 = vunpack.c.l.b16 %v1857
        %v1899 = vunpack.c.h.b16 %v1857
        %v1900 = vunpack.c.l.b16 %v1858
        %v1901 = vunpack.c.h.b16 %v1858
        %v1902 = vunpack.c.l.b16 %v1859
        %v1903 = vunpack.c.h.b16 %v1859
        %v1904 = vunpack.c.l.b16 %v1860
        %v1905 = vunpack.c.h.b16 %v1860
        %v1906 = vunpack.c.l.b16 %v1861
        %v1907 = vunpack.c.h.b16 %v1861
        %v1908 = vunpack.c.l.b16 %v1862
        %v1909 = vunpack.c.h.b16 %v1862
        %v1910 = vunpack.c.l.b16 %v1863
        %v1911 = vunpack.c.h.b16 %v1863
        %v1912 = vpack.c.b16 %v1880, %v1880
        %v1913 = vpack.c.b16 %v1881, %v1881
        %v1914 = vpack.c.b16 %v1882, %v1882
        %v1915 = vpack.c.b16 %v1883, %v1883
        %v1916 = vpack.c.b16 %v1884, %v1884
        %v1917 = vpack.c.b16 %v1885, %v1885
        %v1918 = vpack.c.b16 %v1886, %v1886
        %v1919 = vpack.c.b16 %v1887, %v1887
        %v1920 = vpack.c.b16 %v1888, %v1888
        %v1921 = vpack.c.b16 %v1889, %v1889
        %v1922 = vpack.c.b16 %v1890, %v1890
        %v1923 = vpack.c.b16 %v1891, %v1891
        %v1924 = vpack.c.b16 %v1892, %v1892
        %v1925 = vpack.c.b16 %v1893, %v1893
        %v1926 = vpack.c.b16 %v1894, %v1894
        %v1927 = vpack.c.b16 %v1895, %v1895
        %v1928 = vpack.c.b16 %v1896, %v1896
        %v1929 = vpack.c.b16 %v1897, %v1897
        %v1930 = vpack.c.b16 %v1898, %v1898
        %v1931 = vpack.c.b16 %v1899, %v1899
        %v1932 = vpack.c.b16 %v1900, %v1900
        %v1933 = vpack.c.b16 %v1901, %v1901
        %v1934 = vpack.c.b16 %v1902, %v1902
        %v1935 = vpack.c.b16 %v1903, %v1903
        %v1936 = vpack.c.b16 %v1904, %v1904
        %v1937 = vpack.c.b16 %v1905, %v1905
        %v1938 = vpack.c.b16 %v1906, %v1906
        %v1939 = vpack.c.b16 %v1907, %v1907
        %v1940 = vpack.c.b16 %v1908, %v1908
        %v1941 = vpack.c.b16 %v1909, %v1909
        %v1942 = vpack.c.b16 %v1910, %v1910
        %v1943 = vpack.c.b16 %v1911, %v1911
        %1944 = vrot.lane.b32.xlu0 %v1912, 96
        %v1945 = vpop.permute.xlu0 %1944
        %1946 = vrot.lane.b32.xlu0 %v1913, 96
        %v1947 = vpop.permute.xlu0 %1946
        %1948 = vrot.lane.b32.xlu0 %v1914, 96
        %v1949 = vpop.permute.xlu0 %1948
        %1950 = vrot.lane.b32.xlu0 %v1915, 96
        %v1951 = vpop.permute.xlu0 %1950
        %1952 = vrot.lane.b32.xlu0 %v1916, 96
        %v1953 = vpop.permute.xlu0 %1952
        %1954 = vrot.lane.b32.xlu0 %v1917, 96
        %v1955 = vpop.permute.xlu0 %1954
        %1956 = vrot.lane.b32.xlu0 %v1918, 96
        %v1957 = vpop.permute.xlu0 %1956
        %1958 = vrot.lane.b32.xlu0 %v1919, 96
        %v1959 = vpop.permute.xlu0 %1958
        %1960 = vrot.lane.b32.xlu0 %v1920, 96
        %v1961 = vpop.permute.xlu0 %1960
        %1962 = vrot.lane.b32.xlu0 %v1921, 96
        %v1963 = vpop.permute.xlu0 %1962
        %1964 = vrot.lane.b32.xlu0 %v1922, 96
        %v1965 = vpop.permute.xlu0 %1964
        %1966 = vrot.lane.b32.xlu0 %v1923, 96
        %v1967 = vpop.permute.xlu0 %1966
        %1968 = vrot.lane.b32.xlu0 %v1924, 96
        %v1969 = vpop.permute.xlu0 %1968
        %1970 = vrot.lane.b32.xlu0 %v1925, 96
        %v1971 = vpop.permute.xlu0 %1970
        %1972 = vrot.lane.b32.xlu0 %v1926, 96
        %v1973 = vpop.permute.xlu0 %1972
        %1974 = vrot.lane.b32.xlu0 %v1927, 96
        %v1975 = vpop.permute.xlu0 %1974
        %1976 = vrot.lane.b32.xlu0 %v1928, 96
        %v1977 = vpop.permute.xlu0 %1976
        %1978 = vrot.lane.b32.xlu0 %v1929, 96
        %v1979 = vpop.permute.xlu0 %1978
        %1980 = vrot.lane.b32.xlu0 %v1930, 96
        %v1981 = vpop.permute.xlu0 %1980
        %1982 = vrot.lane.b32.xlu0 %v1931, 96
        %v1983 = vpop.permute.xlu0 %1982
        %1984 = vrot.lane.b32.xlu0 %v1932, 96
        %v1985 = vpop.permute.xlu0 %1984
        %1986 = vrot.lane.b32.xlu0 %v1933, 96
        %v1987 = vpop.permute.xlu0 %1986
        %1988 = vrot.lane.b32.xlu0 %v1934, 96
        %v1989 = vpop.permute.xlu0 %1988
        %1990 = vrot.lane.b32.xlu0 %v1935, 96
        %v1991 = vpop.permute.xlu0 %1990
        %1992 = vrot.lane.b32.xlu0 %v1936, 96
        %v1993 = vpop.permute.xlu0 %1992
        %1994 = vrot.lane.b32.xlu0 %v1937, 96
        %v1995 = vpop.permute.xlu0 %1994
        %1996 = vrot.lane.b32.xlu0 %v1938, 96
        %v1997 = vpop.permute.xlu0 %1996
        %1998 = vrot.lane.b32.xlu0 %v1939, 96
        %v1999 = vpop.permute.xlu0 %1998
        %2000 = vrot.lane.b32.xlu0 %v1940, 96
        %v2001 = vpop.permute.xlu0 %2000
        %2002 = vrot.lane.b32.xlu0 %v1941, 96
        %v2003 = vpop.permute.xlu0 %2002
        %2004 = vrot.lane.b32.xlu0 %v1942, 96
        %v2005 = vpop.permute.xlu0 %2004
        %2006 = vrot.lane.b32.xlu0 %v1943, 96
        %v2007 = vpop.permute.xlu0 %2006
        %vm2040 = vcmask 913152
        %2041 = vst.msk [vmem:[#allocation3] sm:$0xf] %vm2040, %v1945
        %2042 = vst.msk [vmem:[#allocation3 + $0x8] sm:$0xf] %vm2040, %v1947
        %2043 = vst.msk [vmem:[#allocation3 + $0x10] sm:$0xf] %vm2040, %v1949
        %2044 = vst.msk [vmem:[#allocation3 + $0x18] sm:$0xf] %vm2040, %v1951
        %2045 = vst.msk [vmem:[#allocation3 + $0x20] sm:$0xf] %vm2040, %v1953
        %2046 = vst.msk [vmem:[#allocation3 + $0x28] sm:$0xf] %vm2040, %v1955
        %2047 = vst.msk [vmem:[#allocation3 + $0x30] sm:$0xf] %vm2040, %v1957
        %2048 = vst.msk [vmem:[#allocation3 + $0x38] sm:$0xf] %vm2040, %v1959
        %2049 = vst.msk [vmem:[#allocation3 + $0x40] sm:$0xf] %vm2040, %v1961
        %2050 = vst.msk [vmem:[#allocation3 + $0x48] sm:$0xf] %vm2040, %v1963
        %2051 = vst.msk [vmem:[#allocation3 + $0x50] sm:$0xf] %vm2040, %v1965
        %2052 = vst.msk [vmem:[#allocation3 + $0x58] sm:$0xf] %vm2040, %v1967
        %2053 = vst.msk [vmem:[#allocation3 + $0x60] sm:$0xf] %vm2040, %v1969
        %2054 = vst.msk [vmem:[#allocation3 + $0x68] sm:$0xf] %vm2040, %v1971
        %2055 = vst.msk [vmem:[#allocation3 + $0x70] sm:$0xf] %vm2040, %v1973
        %2056 = vst.msk [vmem:[#allocation3 + $0x78] sm:$0xf] %vm2040, %v1975
        %2057 = vst.msk [vmem:[#allocation3 + $0x80] sm:$0xf] %vm2040, %v1977
        %2058 = vst.msk [vmem:[#allocation3 + $0x88] sm:$0xf] %vm2040, %v1979
        %2059 = vst.msk [vmem:[#allocation3 + $0x90] sm:$0xf] %vm2040, %v1981
        %2060 = vst.msk [vmem:[#allocation3 + $0x98] sm:$0xf] %vm2040, %v1983
        %2061 = vst.msk [vmem:[#allocation3 + $0xa0] sm:$0xf] %vm2040, %v1985
        %2062 = vst.msk [vmem:[#allocation3 + $0xa8] sm:$0xf] %vm2040, %v1987
        %2063 = vst.msk [vmem:[#allocation3 + $0xb0] sm:$0xf] %vm2040, %v1989
        %2064 = vst.msk [vmem:[#allocation3 + $0xb8] sm:$0xf] %vm2040, %v1991
        %2065 = vst.msk [vmem:[#allocation3 + $0xc0] sm:$0xf] %vm2040, %v1993
        %2066 = vst.msk [vmem:[#allocation3 + $0xc8] sm:$0xf] %vm2040, %v1995
        %2067 = vst.msk [vmem:[#allocation3 + $0xd0] sm:$0xf] %vm2040, %v1997
        %2068 = vst.msk [vmem:[#allocation3 + $0xd8] sm:$0xf] %vm2040, %v1999
        %2069 = vst.msk [vmem:[#allocation3 + $0xe0] sm:$0xf] %vm2040, %v2001
        %2070 = vst.msk [vmem:[#allocation3 + $0xe8] sm:$0xf] %vm2040, %v2003
        %2071 = vst.msk [vmem:[#allocation3 + $0xf0] sm:$0xf] %vm2040, %v2005
        %2072 = vst.msk [vmem:[#allocation3 + $0xf8] sm:$0xf] %vm2040, %v2007
        %v2073 = vld [vmem:[%s1815 + $0x1] sm:$0xff]
        %v2074 = vld [vmem:[%s1815 + $0x9] sm:$0xff]
        %v2075 = vld [vmem:[%s1815 + $0x19] sm:$0xff]
        %v2076 = vld [vmem:[%s1815 + $0x21] sm:$0xff]
        %v2077 = vld [vmem:[%s1815 + $0x31] sm:$0xff]
        %v2078 = vld [vmem:[%s1815 + $0x39] sm:$0xff]
        %v2079 = vld [vmem:[%s1815 + $0x49] sm:$0xff]
        %v2080 = vld [vmem:[%s1815 + $0x51] sm:$0xff]
        %v2081 = vld [vmem:[%s1815 + $0x61] sm:$0xff]
        %v2082 = vld [vmem:[%s1815 + $0x69] sm:$0xff]
        %v2083 = vld [vmem:[%s1815 + $0x79] sm:$0xff]
        %v2084 = vld [vmem:[%s1815 + $0x81] sm:$0xff]
        %v2085 = vld [vmem:[%s1815 + $0x91] sm:$0xff]
        %v2086 = vld [vmem:[%s1815 + $0x99] sm:$0xff]
        %v2087 = vld [vmem:[%s1815 + $0xa9] sm:$0xff]
        %v2088 = vld [vmem:[%s1815 + $0xb1] sm:$0xff]
        %v2089 = vld [vmem:[%s1815 + $0xc1] sm:$0xff]
        %v2090 = vld [vmem:[%s1815 + $0xc9] sm:$0xff]
        %v2091 = vld [vmem:[%s1815 + $0xd9] sm:$0xff]
        %v2092 = vld [vmem:[%s1815 + $0xe1] sm:$0xff]
        %v2093 = vld [vmem:[%s1815 + $0xf1] sm:$0xff]
        %v2094 = vld [vmem:[%s1815 + $0xf9] sm:$0xff]
        %v2095 = vld [vmem:[%s1815 + $0x109] sm:$0xff]
        %v2096 = vld [vmem:[%s1815 + $0x111] sm:$0xff]
        %v2097 = vld [vmem:[%s1815 + $0x121] sm:$0xff]
        %v2098 = vld [vmem:[%s1815 + $0x129] sm:$0xff]
        %v2099 = vld [vmem:[%s1815 + $0x139] sm:$0xff]
        %v2100 = vld [vmem:[%s1815 + $0x141] sm:$0xff]
        %v2101 = vld [vmem:[%s1815 + $0x151] sm:$0xff]
        %v2102 = vld [vmem:[%s1815 + $0x159] sm:$0xff]
        %v2103 = vld [vmem:[%s1815 + $0x169] sm:$0xff]
        %v2104 = vld [vmem:[%s1815 + $0x171] sm:$0xff]
        %v2105 = vpack.c.bf16 %v2074, %v2073
        %v2106 = vpack.c.bf16 %v2076, %v2075
        %v2107 = vpack.c.bf16 %v2078, %v2077
        %v2108 = vpack.c.bf16 %v2080, %v2079
        %v2109 = vpack.c.bf16 %v2082, %v2081
        %v2110 = vpack.c.bf16 %v2084, %v2083
        %v2111 = vpack.c.bf16 %v2086, %v2085
        %v2112 = vpack.c.bf16 %v2088, %v2087
        %v2113 = vpack.c.bf16 %v2090, %v2089
        %v2114 = vpack.c.bf16 %v2092, %v2091
        %v2115 = vpack.c.bf16 %v2094, %v2093
        %v2116 = vpack.c.bf16 %v2096, %v2095
        %v2117 = vpack.c.bf16 %v2098, %v2097
        %v2118 = vpack.c.bf16 %v2100, %v2099
        %v2119 = vpack.c.bf16 %v2102, %v2101
        %v2120 = vpack.c.bf16 %v2104, %v2103
        %v2137 = vunpack.c.l.b16 %v2105
        %v2138 = vunpack.c.h.b16 %v2105
        %v2139 = vunpack.c.l.b16 %v2106
        %v2140 = vunpack.c.h.b16 %v2106
        %v2141 = vunpack.c.l.b16 %v2107
        %v2142 = vunpack.c.h.b16 %v2107
        %v2143 = vunpack.c.l.b16 %v2108
        %v2144 = vunpack.c.h.b16 %v2108
        %v2145 = vunpack.c.l.b16 %v2109
        %v2146 = vunpack.c.h.b16 %v2109
        %v2147 = vunpack.c.l.b16 %v2110
        %v2148 = vunpack.c.h.b16 %v2110
        %v2149 = vunpack.c.l.b16 %v2111
        %v2150 = vunpack.c.h.b16 %v2111
        %v2151 = vunpack.c.l.b16 %v2112
        %v2152 = vunpack.c.h.b16 %v2112
        %v2153 = vunpack.c.l.b16 %v2113
        %v2154 = vunpack.c.h.b16 %v2113
        %v2155 = vunpack.c.l.b16 %v2114
        %v2156 = vunpack.c.h.b16 %v2114
        %v2157 = vunpack.c.l.b16 %v2115
        %v2158 = vunpack.c.h.b16 %v2115
        %v2159 = vunpack.c.l.b16 %v2116
        %v2160 = vunpack.c.h.b16 %v2116
        %v2161 = vunpack.c.l.b16 %v2117
        %v2162 = vunpack.c.h.b16 %v2117
        %v2163 = vunpack.c.l.b16 %v2118
        %v2164 = vunpack.c.h.b16 %v2118
        %v2165 = vunpack.c.l.b16 %v2119
        %v2166 = vunpack.c.h.b16 %v2119
        %v2167 = vunpack.c.l.b16 %v2120
        %v2168 = vunpack.c.h.b16 %v2120
        %v2169 = vpack.c.b16 %v2137, %v2137
        %v2170 = vpack.c.b16 %v2138, %v2138
        %v2171 = vpack.c.b16 %v2139, %v2139
        %v2172 = vpack.c.b16 %v2140, %v2140
        %v2173 = vpack.c.b16 %v2141, %v2141
        %v2174 = vpack.c.b16 %v2142, %v2142
        %v2175 = vpack.c.b16 %v2143, %v2143
        %v2176 = vpack.c.b16 %v2144, %v2144
        %v2177 = vpack.c.b16 %v2145, %v2145
        %v2178 = vpack.c.b16 %v2146, %v2146
        %v2179 = vpack.c.b16 %v2147, %v2147
        %v2180 = vpack.c.b16 %v2148, %v2148
        %v2181 = vpack.c.b16 %v2149, %v2149
        %v2182 = vpack.c.b16 %v2150, %v2150
        %v2183 = vpack.c.b16 %v2151, %v2151
        %v2184 = vpack.c.b16 %v2152, %v2152
        %v2185 = vpack.c.b16 %v2153, %v2153
        %v2186 = vpack.c.b16 %v2154, %v2154
        %v2187 = vpack.c.b16 %v2155, %v2155
        %v2188 = vpack.c.b16 %v2156, %v2156
        %v2189 = vpack.c.b16 %v2157, %v2157
        %v2190 = vpack.c.b16 %v2158, %v2158
        %v2191 = vpack.c.b16 %v2159, %v2159
        %v2192 = vpack.c.b16 %v2160, %v2160
        %v2193 = vpack.c.b16 %v2161, %v2161
        %v2194 = vpack.c.b16 %v2162, %v2162
        %v2195 = vpack.c.b16 %v2163, %v2163
        %v2196 = vpack.c.b16 %v2164, %v2164
        %v2197 = vpack.c.b16 %v2165, %v2165
        %v2198 = vpack.c.b16 %v2166, %v2166
        %v2199 = vpack.c.b16 %v2167, %v2167
        %v2200 = vpack.c.b16 %v2168, %v2168
        %2201 = vrot.lane.b32.xlu0 %v2169, 112
        %v2202 = vpop.permute.xlu0 %2201
        %2203 = vrot.lane.b32.xlu0 %v2170, 112
        %v2204 = vpop.permute.xlu0 %2203
        %2205 = vrot.lane.b32.xlu0 %v2171, 112
        %v2206 = vpop.permute.xlu0 %2205
        %2207 = vrot.lane.b32.xlu0 %v2172, 112
        %v2208 = vpop.permute.xlu0 %2207
        %2209 = vrot.lane.b32.xlu0 %v2173, 112
        %v2210 = vpop.permute.xlu0 %2209
        %2211 = vrot.lane.b32.xlu0 %v2174, 112
        %v2212 = vpop.permute.xlu0 %2211
        %2213 = vrot.lane.b32.xlu0 %v2175, 112
        %v2214 = vpop.permute.xlu0 %2213
        %2215 = vrot.lane.b32.xlu0 %v2176, 112
        %v2216 = vpop.permute.xlu0 %2215
        %2217 = vrot.lane.b32.xlu0 %v2177, 112
        %v2218 = vpop.permute.xlu0 %2217
        %2219 = vrot.lane.b32.xlu0 %v2178, 112
        %v2220 = vpop.permute.xlu0 %2219
        %2221 = vrot.lane.b32.xlu0 %v2179, 112
        %v2222 = vpop.permute.xlu0 %2221
        %2223 = vrot.lane.b32.xlu0 %v2180, 112
        %v2224 = vpop.permute.xlu0 %2223
        %2225 = vrot.lane.b32.xlu0 %v2181, 112
        %v2226 = vpop.permute.xlu0 %2225
        %2227 = vrot.lane.b32.xlu0 %v2182, 112
        %v2228 = vpop.permute.xlu0 %2227
        %2229 = vrot.lane.b32.xlu0 %v2183, 112
        %v2230 = vpop.permute.xlu0 %2229
        %2231 = vrot.lane.b32.xlu0 %v2184, 112
        %v2232 = vpop.permute.xlu0 %2231
        %2233 = vrot.lane.b32.xlu0 %v2185, 112
        %v2234 = vpop.permute.xlu0 %2233
        %2235 = vrot.lane.b32.xlu0 %v2186, 112
        %v2236 = vpop.permute.xlu0 %2235
        %2237 = vrot.lane.b32.xlu0 %v2187, 112
        %v2238 = vpop.permute.xlu0 %2237
        %2239 = vrot.lane.b32.xlu0 %v2188, 112
        %v2240 = vpop.permute.xlu0 %2239
        %2241 = vrot.lane.b32.xlu0 %v2189, 112
        %v2242 = vpop.permute.xlu0 %2241
        %2243 = vrot.lane.b32.xlu0 %v2190, 112
        %v2244 = vpop.permute.xlu0 %2243
        %2245 = vrot.lane.b32.xlu0 %v2191, 112
        %v2246 = vpop.permute.xlu0 %2245
        %2247 = vrot.lane.b32.xlu0 %v2192, 112
        %v2248 = vpop.permute.xlu0 %2247
        %2249 = vrot.lane.b32.xlu0 %v2193, 112
        %v2250 = vpop.permute.xlu0 %2249
        %2251 = vrot.lane.b32.xlu0 %v2194, 112
        %v2252 = vpop.permute.xlu0 %2251
        %2253 = vrot.lane.b32.xlu0 %v2195, 112
        %v2254 = vpop.permute.xlu0 %2253
        %2255 = vrot.lane.b32.xlu0 %v2196, 112
        %v2256 = vpop.permute.xlu0 %2255
        %2257 = vrot.lane.b32.xlu0 %v2197, 112
        %v2258 = vpop.permute.xlu0 %2257
        %2259 = vrot.lane.b32.xlu0 %v2198, 112
        %v2260 = vpop.permute.xlu0 %2259
        %2261 = vrot.lane.b32.xlu0 %v2199, 112
        %v2262 = vpop.permute.xlu0 %2261
        %2263 = vrot.lane.b32.xlu0 %v2200, 112
        %v2264 = vpop.permute.xlu0 %2263
        %vm2297 = vcmask 1044352
        %2298 = vst.msk [vmem:[#allocation3] sm:$0xf] %vm2297, %v2202
        %2299 = vst.msk [vmem:[#allocation3 + $0x8] sm:$0xf] %vm2297, %v2204
        %2300 = vst.msk [vmem:[#allocation3 + $0x10] sm:$0xf] %vm2297, %v2206
        %2301 = vst.msk [vmem:[#allocation3 + $0x18] sm:$0xf] %vm2297, %v2208
        %2302 = vst.msk [vmem:[#allocation3 + $0x20] sm:$0xf] %vm2297, %v2210
        %2303 = vst.msk [vmem:[#allocation3 + $0x28] sm:$0xf] %vm2297, %v2212
        %2304 = vst.msk [vmem:[#allocation3 + $0x30] sm:$0xf] %vm2297, %v2214
        %2305 = vst.msk [vmem:[#allocation3 + $0x38] sm:$0xf] %vm2297, %v2216
        %2306 = vst.msk [vmem:[#allocation3 + $0x40] sm:$0xf] %vm2297, %v2218
        %2307 = vst.msk [vmem:[#allocation3 + $0x48] sm:$0xf] %vm2297, %v2220
        %2308 = vst.msk [vmem:[#allocation3 + $0x50] sm:$0xf] %vm2297, %v2222
        %2309 = vst.msk [vmem:[#allocation3 + $0x58] sm:$0xf] %vm2297, %v2224
        %2310 = vst.msk [vmem:[#allocation3 + $0x60] sm:$0xf] %vm2297, %v2226
        %2311 = vst.msk [vmem:[#allocation3 + $0x68] sm:$0xf] %vm2297, %v2228
        %2312 = vst.msk [vmem:[#allocation3 + $0x70] sm:$0xf] %vm2297, %v2230
        %2313 = vst.msk [vmem:[#allocation3 + $0x78] sm:$0xf] %vm2297, %v2232
        %2314 = vst.msk [vmem:[#allocation3 + $0x80] sm:$0xf] %vm2297, %v2234
        %2315 = vst.msk [vmem:[#allocation3 + $0x88] sm:$0xf] %vm2297, %v2236
        %2316 = vst.msk [vmem:[#allocation3 + $0x90] sm:$0xf] %vm2297, %v2238
        %2317 = vst.msk [vmem:[#allocation3 + $0x98] sm:$0xf] %vm2297, %v2240
        %2318 = vst.msk [vmem:[#allocation3 + $0xa0] sm:$0xf] %vm2297, %v2242
        %2319 = vst.msk [vmem:[#allocation3 + $0xa8] sm:$0xf] %vm2297, %v2244
        %2320 = vst.msk [vmem:[#allocation3 + $0xb0] sm:$0xf] %vm2297, %v2246
        %2321 = vst.msk [vmem:[#allocation3 + $0xb8] sm:$0xf] %vm2297, %v2248
        %2322 = vst.msk [vmem:[#allocation3 + $0xc0] sm:$0xf] %vm2297, %v2250
        %2323 = vst.msk [vmem:[#allocation3 + $0xc8] sm:$0xf] %vm2297, %v2252
        %2324 = vst.msk [vmem:[#allocation3 + $0xd0] sm:$0xf] %vm2297, %v2254
        %2325 = vst.msk [vmem:[#allocation3 + $0xd8] sm:$0xf] %vm2297, %v2256
        %2326 = vst.msk [vmem:[#allocation3 + $0xe0] sm:$0xf] %vm2297, %v2258
        %2327 = vst.msk [vmem:[#allocation3 + $0xe8] sm:$0xf] %vm2297, %v2260
        %2328 = vst.msk [vmem:[#allocation3 + $0xf0] sm:$0xf] %vm2297, %v2262
        %2329 = vst.msk [vmem:[#allocation3 + $0xf8] sm:$0xf] %vm2297, %v2264
        %v2330 = vld [vmem:[%s1815 + $0x2] sm:$0xff]
        %v2331 = vld [vmem:[%s1815 + $0xa] sm:$0xff]
        %v2332 = vld [vmem:[%s1815 + $0x1a] sm:$0xff]
        %v2333 = vld [vmem:[%s1815 + $0x22] sm:$0xff]
        %v2334 = vld [vmem:[%s1815 + $0x32] sm:$0xff]
        %v2335 = vld [vmem:[%s1815 + $0x3a] sm:$0xff]
        %v2336 = vld [vmem:[%s1815 + $0x4a] sm:$0xff]
        %v2337 = vld [vmem:[%s1815 + $0x52] sm:$0xff]
        %v2338 = vld [vmem:[%s1815 + $0x62] sm:$0xff]
        %v2339 = vld [vmem:[%s1815 + $0x6a] sm:$0xff]
        %v2340 = vld [vmem:[%s1815 + $0x7a] sm:$0xff]
        %v2341 = vld [vmem:[%s1815 + $0x82] sm:$0xff]
        %v2342 = vld [vmem:[%s1815 + $0x92] sm:$0xff]
        %v2343 = vld [vmem:[%s1815 + $0x9a] sm:$0xff]
        %v2344 = vld [vmem:[%s1815 + $0xaa] sm:$0xff]
        %v2345 = vld [vmem:[%s1815 + $0xb2] sm:$0xff]
        %v2346 = vld [vmem:[%s1815 + $0xc2] sm:$0xff]
        %v2347 = vld [vmem:[%s1815 + $0xca] sm:$0xff]
        %v2348 = vld [vmem:[%s1815 + $0xda] sm:$0xff]
        %v2349 = vld [vmem:[%s1815 + $0xe2] sm:$0xff]
        %v2350 = vld [vmem:[%s1815 + $0xf2] sm:$0xff]
        %v2351 = vld [vmem:[%s1815 + $0xfa] sm:$0xff]
        %v2352 = vld [vmem:[%s1815 + $0x10a] sm:$0xff]
        %v2353 = vld [vmem:[%s1815 + $0x112] sm:$0xff]
        %v2354 = vld [vmem:[%s1815 + $0x122] sm:$0xff]
        %v2355 = vld [vmem:[%s1815 + $0x12a] sm:$0xff]
        %v2356 = vld [vmem:[%s1815 + $0x13a] sm:$0xff]
        %v2357 = vld [vmem:[%s1815 + $0x142] sm:$0xff]
        %v2358 = vld [vmem:[%s1815 + $0x152] sm:$0xff]
        %v2359 = vld [vmem:[%s1815 + $0x15a] sm:$0xff]
        %v2360 = vld [vmem:[%s1815 + $0x16a] sm:$0xff]
        %v2361 = vld [vmem:[%s1815 + $0x172] sm:$0xff]
        %v2362 = vpack.c.bf16 %v2331, %v2330
        %v2363 = vpack.c.bf16 %v2333, %v2332
        %v2364 = vpack.c.bf16 %v2335, %v2334
        %v2365 = vpack.c.bf16 %v2337, %v2336
        %v2366 = vpack.c.bf16 %v2339, %v2338
        %v2367 = vpack.c.bf16 %v2341, %v2340
        %v2368 = vpack.c.bf16 %v2343, %v2342
        %v2369 = vpack.c.bf16 %v2345, %v2344
        %v2370 = vpack.c.bf16 %v2347, %v2346
        %v2371 = vpack.c.bf16 %v2349, %v2348
        %v2372 = vpack.c.bf16 %v2351, %v2350
        %v2373 = vpack.c.bf16 %v2353, %v2352
        %v2374 = vpack.c.bf16 %v2355, %v2354
        %v2375 = vpack.c.bf16 %v2357, %v2356
        %v2376 = vpack.c.bf16 %v2359, %v2358
        %v2377 = vpack.c.bf16 %v2361, %v2360
        %v2394 = vunpack.c.l.b16 %v2362
        %v2395 = vunpack.c.h.b16 %v2362
        %v2396 = vunpack.c.l.b16 %v2363
        %v2397 = vunpack.c.h.b16 %v2363
        %v2398 = vunpack.c.l.b16 %v2364
        %v2399 = vunpack.c.h.b16 %v2364
        %v2400 = vunpack.c.l.b16 %v2365
        %v2401 = vunpack.c.h.b16 %v2365
        %v2402 = vunpack.c.l.b16 %v2366
        %v2403 = vunpack.c.h.b16 %v2366
        %v2404 = vunpack.c.l.b16 %v2367
        %v2405 = vunpack.c.h.b16 %v2367
        %v2406 = vunpack.c.l.b16 %v2368
        %v2407 = vunpack.c.h.b16 %v2368
        %v2408 = vunpack.c.l.b16 %v2369
        %v2409 = vunpack.c.h.b16 %v2369
        %v2410 = vunpack.c.l.b16 %v2370
        %v2411 = vunpack.c.h.b16 %v2370
        %v2412 = vunpack.c.l.b16 %v2371
        %v2413 = vunpack.c.h.b16 %v2371
        %v2414 = vunpack.c.l.b16 %v2372
        %v2415 = vunpack.c.h.b16 %v2372
        %v2416 = vunpack.c.l.b16 %v2373
        %v2417 = vunpack.c.h.b16 %v2373
        %v2418 = vunpack.c.l.b16 %v2374
        %v2419 = vunpack.c.h.b16 %v2374
        %v2420 = vunpack.c.l.b16 %v2375
        %v2421 = vunpack.c.h.b16 %v2375
        %v2422 = vunpack.c.l.b16 %v2376
        %v2423 = vunpack.c.h.b16 %v2376
        %v2424 = vunpack.c.l.b16 %v2377
        %v2425 = vunpack.c.h.b16 %v2377
        %v2426 = vpack.c.b16 %v2394, %v2394
        %v2427 = vpack.c.b16 %v2395, %v2395
        %v2428 = vpack.c.b16 %v2396, %v2396
        %v2429 = vpack.c.b16 %v2397, %v2397
        %v2430 = vpack.c.b16 %v2398, %v2398
        %v2431 = vpack.c.b16 %v2399, %v2399
        %v2432 = vpack.c.b16 %v2400, %v2400
        %v2433 = vpack.c.b16 %v2401, %v2401
        %v2434 = vpack.c.b16 %v2402, %v2402
        %v2435 = vpack.c.b16 %v2403, %v2403
        %v2436 = vpack.c.b16 %v2404, %v2404
        %v2437 = vpack.c.b16 %v2405, %v2405
        %v2438 = vpack.c.b16 %v2406, %v2406
        %v2439 = vpack.c.b16 %v2407, %v2407
        %v2440 = vpack.c.b16 %v2408, %v2408
        %v2441 = vpack.c.b16 %v2409, %v2409
        %v2442 = vpack.c.b16 %v2410, %v2410
        %v2443 = vpack.c.b16 %v2411, %v2411
        %v2444 = vpack.c.b16 %v2412, %v2412
        %v2445 = vpack.c.b16 %v2413, %v2413
        %v2446 = vpack.c.b16 %v2414, %v2414
        %v2447 = vpack.c.b16 %v2415, %v2415
        %v2448 = vpack.c.b16 %v2416, %v2416
        %v2449 = vpack.c.b16 %v2417, %v2417
        %v2450 = vpack.c.b16 %v2418, %v2418
        %v2451 = vpack.c.b16 %v2419, %v2419
        %v2452 = vpack.c.b16 %v2420, %v2420
        %v2453 = vpack.c.b16 %v2421, %v2421
        %v2454 = vpack.c.b16 %v2422, %v2422
        %v2455 = vpack.c.b16 %v2423, %v2423
        %v2456 = vpack.c.b16 %v2424, %v2424
        %v2457 = vpack.c.b16 %v2425, %v2425
        %2490 = vst.msk [vmem:[#allocation3 + $0x4] sm:$0xf] %vm497, %v2426
        %2491 = vst.msk [vmem:[#allocation3 + $0xc] sm:$0xf] %vm497, %v2427
        %2492 = vst.msk [vmem:[#allocation3 + $0x14] sm:$0xf] %vm497, %v2428
        %2493 = vst.msk [vmem:[#allocation3 + $0x1c] sm:$0xf] %vm497, %v2429
        %2494 = vst.msk [vmem:[#allocation3 + $0x24] sm:$0xf] %vm497, %v2430
        %2495 = vst.msk [vmem:[#allocation3 + $0x2c] sm:$0xf] %vm497, %v2431
        %2496 = vst.msk [vmem:[#allocation3 + $0x34] sm:$0xf] %vm497, %v2432
        %2497 = vst.msk [vmem:[#allocation3 + $0x3c] sm:$0xf] %vm497, %v2433
        %2498 = vst.msk [vmem:[#allocation3 + $0x44] sm:$0xf] %vm497, %v2434
        %2499 = vst.msk [vmem:[#allocation3 + $0x4c] sm:$0xf] %vm497, %v2435
        %2500 = vst.msk [vmem:[#allocation3 + $0x54] sm:$0xf] %vm497, %v2436
        %2501 = vst.msk [vmem:[#allocation3 + $0x5c] sm:$0xf] %vm497, %v2437
        %2502 = vst.msk [vmem:[#allocation3 + $0x64] sm:$0xf] %vm497, %v2438
        %2503 = vst.msk [vmem:[#allocation3 + $0x6c] sm:$0xf] %vm497, %v2439
        %2504 = vst.msk [vmem:[#allocation3 + $0x74] sm:$0xf] %vm497, %v2440
        %2505 = vst.msk [vmem:[#allocation3 + $0x7c] sm:$0xf] %vm497, %v2441
        %2506 = vst.msk [vmem:[#allocation3 + $0x84] sm:$0xf] %vm497, %v2442
        %2507 = vst.msk [vmem:[#allocation3 + $0x8c] sm:$0xf] %vm497, %v2443
        %2508 = vst.msk [vmem:[#allocation3 + $0x94] sm:$0xf] %vm497, %v2444
        %2509 = vst.msk [vmem:[#allocation3 + $0x9c] sm:$0xf] %vm497, %v2445
        %2510 = vst.msk [vmem:[#allocation3 + $0xa4] sm:$0xf] %vm497, %v2446
        %2511 = vst.msk [vmem:[#allocation3 + $0xac] sm:$0xf] %vm497, %v2447
        %2512 = vst.msk [vmem:[#allocation3 + $0xb4] sm:$0xf] %vm497, %v2448
        %2513 = vst.msk [vmem:[#allocation3 + $0xbc] sm:$0xf] %vm497, %v2449
        %2514 = vst.msk [vmem:[#allocation3 + $0xc4] sm:$0xf] %vm497, %v2450
        %2515 = vst.msk [vmem:[#allocation3 + $0xcc] sm:$0xf] %vm497, %v2451
        %2516 = vst.msk [vmem:[#allocation3 + $0xd4] sm:$0xf] %vm497, %v2452
        %2517 = vst.msk [vmem:[#allocation3 + $0xdc] sm:$0xf] %vm497, %v2453
        %2518 = vst.msk [vmem:[#allocation3 + $0xe4] sm:$0xf] %vm497, %v2454
        %2519 = vst.msk [vmem:[#allocation3 + $0xec] sm:$0xf] %vm497, %v2455
        %2520 = vst.msk [vmem:[#allocation3 + $0xf4] sm:$0xf] %vm497, %v2456
        %2521 = vst.msk [vmem:[#allocation3 + $0xfc] sm:$0xf] %vm497, %v2457
        %v2522 = vld [vmem:[%s1] sm:$0xff]
        %v2523 = vld [vmem:[#allocation3] sm:$0xff]
        %v2524 = vld [vmem:[#allocation3 + $0x8] sm:$0xff]
        %v2525 = vld [vmem:[#allocation3 + $0x10] sm:$0xff]
        %v2526 = vld [vmem:[#allocation3 + $0x18] sm:$0xff]
        %v2527 = vld [vmem:[#allocation3 + $0x20] sm:$0xff]
        %v2528 = vld [vmem:[#allocation3 + $0x28] sm:$0xff]
        %v2529 = vld [vmem:[#allocation3 + $0x30] sm:$0xff]
        %v2530 = vld [vmem:[#allocation3 + $0x38] sm:$0xff]
        %v2531 = vld [vmem:[#allocation3 + $0x40] sm:$0xff]
        %v2532 = vld [vmem:[#allocation3 + $0x48] sm:$0xff]
        %v2533 = vld [vmem:[#allocation3 + $0x50] sm:$0xff]
        %v2534 = vld [vmem:[#allocation3 + $0x58] sm:$0xff]
        %v2535 = vld [vmem:[#allocation3 + $0x60] sm:$0xff]
        %v2536 = vld [vmem:[#allocation3 + $0x68] sm:$0xff]
        %v2537 = vld [vmem:[#allocation3 + $0x70] sm:$0xff]
        %v2538 = vld [vmem:[#allocation3 + $0x78] sm:$0xff]
        %v2539 = vld [vmem:[#allocation3 + $0x80] sm:$0xff]
        %v2540 = vld [vmem:[#allocation3 + $0x88] sm:$0xff]
        %v2541 = vld [vmem:[#allocation3 + $0x90] sm:$0xff]
        %v2542 = vld [vmem:[#allocation3 + $0x98] sm:$0xff]
        %v2543 = vld [vmem:[#allocation3 + $0xa0] sm:$0xff]
        %v2544 = vld [vmem:[#allocation3 + $0xa8] sm:$0xff]
        %v2545 = vld [vmem:[#allocation3 + $0xb0] sm:$0xff]
        %v2546 = vld [vmem:[#allocation3 + $0xb8] sm:$0xff]
        %v2547 = vld [vmem:[#allocation3 + $0xc0] sm:$0xff]
        %v2548 = vld [vmem:[#allocation3 + $0xc8] sm:$0xff]
        %v2549 = vld [vmem:[#allocation3 + $0xd0] sm:$0xff]
        %v2550 = vld [vmem:[#allocation3 + $0xd8] sm:$0xff]
        %v2551 = vld [vmem:[#allocation3 + $0xe0] sm:$0xff]
        %v2552 = vld [vmem:[#allocation3 + $0xe8] sm:$0xff]
        %v2553 = vld [vmem:[#allocation3 + $0xf0] sm:$0xff]
        %v2554 = vld [vmem:[#allocation3 + $0xf8] sm:$0xff]
        %v2556 = vunpack.c.l.b16 %v2522
        %v2557 = vunpack.c.h.b16 %v2522
        %v2558 = vpack.c.b16 %v2556, %v2556
        %v2559 = vpack.c.b16 %v2557, %v2557
        %v2593 = vunpack.c.l.b16 %v2523
        %v2594 = vunpack.c.h.b16 %v2523
        %v2595 = vunpack.c.l.b16 %v2524
        %v2596 = vunpack.c.h.b16 %v2524
        %v2597 = vunpack.c.l.b16 %v2525
        %v2598 = vunpack.c.h.b16 %v2525
        %v2599 = vunpack.c.l.b16 %v2526
        %v2600 = vunpack.c.h.b16 %v2526
        %v2601 = vunpack.c.l.b16 %v2527
        %v2602 = vunpack.c.h.b16 %v2527
        %v2603 = vunpack.c.l.b16 %v2528
        %v2604 = vunpack.c.h.b16 %v2528
        %v2605 = vunpack.c.l.b16 %v2529
        %v2606 = vunpack.c.h.b16 %v2529
        %v2607 = vunpack.c.l.b16 %v2530
        %v2608 = vunpack.c.h.b16 %v2530
        %v2609 = vunpack.c.l.b16 %v2531
        %v2610 = vunpack.c.h.b16 %v2531
        %v2611 = vunpack.c.l.b16 %v2532
        %v2612 = vunpack.c.h.b16 %v2532
        %v2613 = vunpack.c.l.b16 %v2533
        %v2614 = vunpack.c.h.b16 %v2533
        %v2615 = vunpack.c.l.b16 %v2534
        %v2616 = vunpack.c.h.b16 %v2534
        %v2617 = vunpack.c.l.b16 %v2535
        %v2618 = vunpack.c.h.b16 %v2535
        %v2619 = vunpack.c.l.b16 %v2536
        %v2620 = vunpack.c.h.b16 %v2536
        %v2621 = vunpack.c.l.b16 %v2537
        %v2622 = vunpack.c.h.b16 %v2537
        %v2623 = vunpack.c.l.b16 %v2538
        %v2624 = vunpack.c.h.b16 %v2538
        %v2625 = vunpack.c.l.b16 %v2539
        %v2626 = vunpack.c.h.b16 %v2539
        %v2627 = vunpack.c.l.b16 %v2540
        %v2628 = vunpack.c.h.b16 %v2540
        %v2629 = vunpack.c.l.b16 %v2541
        %v2630 = vunpack.c.h.b16 %v2541
        %v2631 = vunpack.c.l.b16 %v2542
        %v2632 = vunpack.c.h.b16 %v2542
        %v2633 = vunpack.c.l.b16 %v2543
        %v2634 = vunpack.c.h.b16 %v2543
        %v2635 = vunpack.c.l.b16 %v2544
        %v2636 = vunpack.c.h.b16 %v2544
        %v2637 = vunpack.c.l.b16 %v2545
        %v2638 = vunpack.c.h.b16 %v2545
        %v2639 = vunpack.c.l.b16 %v2546
        %v2640 = vunpack.c.h.b16 %v2546
        %v2641 = vunpack.c.l.b16 %v2547
        %v2642 = vunpack.c.h.b16 %v2547
        %v2643 = vunpack.c.l.b16 %v2548
        %v2644 = vunpack.c.h.b16 %v2548
        %v2645 = vunpack.c.l.b16 %v2549
        %v2646 = vunpack.c.h.b16 %v2549
        %v2647 = vunpack.c.l.b16 %v2550
        %v2648 = vunpack.c.h.b16 %v2550
        %v2649 = vunpack.c.l.b16 %v2551
        %v2650 = vunpack.c.h.b16 %v2551
        %v2651 = vunpack.c.l.b16 %v2552
        %v2652 = vunpack.c.h.b16 %v2552
        %v2653 = vunpack.c.l.b16 %v2553
        %v2654 = vunpack.c.h.b16 %v2553
        %v2655 = vunpack.c.l.b16 %v2554
        %v2656 = vunpack.c.h.b16 %v2554
        %v2657 = vpack.c.b16 %v2595, %v2593
        %v2658 = vpack.c.b16 %v2596, %v2594
        %v2659 = vpack.c.b16 %v2599, %v2597
        %v2660 = vpack.c.b16 %v2600, %v2598
        %v2661 = vpack.c.b16 %v2603, %v2601
        %v2662 = vpack.c.b16 %v2604, %v2602
        %v2663 = vpack.c.b16 %v2607, %v2605
        %v2664 = vpack.c.b16 %v2608, %v2606
        %v2665 = vpack.c.b16 %v2611, %v2609
        %v2666 = vpack.c.b16 %v2612, %v2610
        %v2667 = vpack.c.b16 %v2615, %v2613
        %v2668 = vpack.c.b16 %v2616, %v2614
        %v2669 = vpack.c.b16 %v2619, %v2617
        %v2670 = vpack.c.b16 %v2620, %v2618
        %v2671 = vpack.c.b16 %v2623, %v2621
        %v2672 = vpack.c.b16 %v2624, %v2622
        %v2673 = vpack.c.b16 %v2627, %v2625
        %v2674 = vpack.c.b16 %v2628, %v2626
        %v2675 = vpack.c.b16 %v2631, %v2629
        %v2676 = vpack.c.b16 %v2632, %v2630
        %v2677 = vpack.c.b16 %v2635, %v2633
        %v2678 = vpack.c.b16 %v2636, %v2634
        %v2679 = vpack.c.b16 %v2639, %v2637
        %v2680 = vpack.c.b16 %v2640, %v2638
        %v2681 = vpack.c.b16 %v2643, %v2641
        %v2682 = vpack.c.b16 %v2644, %v2642
        %v2683 = vpack.c.b16 %v2647, %v2645
        %v2684 = vpack.c.b16 %v2648, %v2646
        %v2685 = vpack.c.b16 %v2651, %v2649
        %v2686 = vpack.c.b16 %v2652, %v2650
        %v2687 = vpack.c.b16 %v2655, %v2653
        %v2688 = vpack.c.b16 %v2656, %v2654
        %v2706 = vsel %vm216, %v2559, 0
        %v2709 = vsel %vm216, %v2658, 0
        %v2712 = vsel %vm216, %v2660, 0
        %v2715 = vsel %vm216, %v2662, 0
        %v2718 = vsel %vm216, %v2664, 0
        %v2721 = vsel %vm216, %v2666, 0
        %v2724 = vsel %vm216, %v2668, 0
        %v2727 = vsel %vm216, %v2670, 0
        %v2730 = vsel %vm216, %v2672, 0
        %v2733 = vsel %vm216, %v2674, 0
        %v2736 = vsel %vm216, %v2676, 0
        %v2739 = vsel %vm216, %v2678, 0
        %v2742 = vsel %vm216, %v2680, 0
        %v2745 = vsel %vm216, %v2682, 0
        %v2748 = vsel %vm216, %v2684, 0
        %v2751 = vsel %vm216, %v2686, 0
        %v2754 = vsel %vm216, %v2688, 0
        %2756 = vmatprep.subr.bf16.mxu0 %v2730
        %2757 = vmatpush1.bf16.xpose.msra.mxu0 %v2671
        %2758 = vmatprep.subr.bf16.mxu0 %v2727
        %2759 = vmatpush1.bf16.xpose.msra.mxu0 %v2669
        %2760 = vmatprep.subr.bf16.mxu0 %v2724
        %2761 = vmatpush1.bf16.xpose.msra.mxu0 %v2667
        %2762 = vmatprep.subr.bf16.mxu0 %v2721
        %2763 = vmatpush1.bf16.xpose.msra.mxu0 %v2665
        %2764 = vmatprep.subr.bf16.mxu0 %v2718
        %2765 = vmatpush1.bf16.xpose.msra.mxu0 %v2663
        %2766 = vmatprep.subr.bf16.mxu0 %v2715
        %2767 = vmatpush1.bf16.xpose.msra.mxu0 %v2661
        %2768 = vmatprep.subr.bf16.mxu0 %v2712
        %2769 = vmatpush1.bf16.xpose.msra.mxu0 %v2659
        %2770 = vmatprep.subr.bf16.mxu0 %v2709
        %2771 = vmatpush1.bf16.xpose.msra.mxu0 %v2657
        %2772 = vmatprep.subr.bf16.mxu0 %v2754
        %2773 = vmatpush2.bf16.xpose.msra.mxu0 %v2687
        %2774 = vmatprep.subr.bf16.mxu0 %v2751
        %2775 = vmatpush2.bf16.xpose.msra.mxu0 %v2685
        %2776 = vmatprep.subr.bf16.mxu0 %v2748
        %2777 = vmatpush2.bf16.xpose.msra.mxu0 %v2683
        %2778 = vmatprep.subr.bf16.mxu0 %v2745
        %2779 = vmatpush2.bf16.xpose.msra.mxu0 %v2681
        %2780 = vmatprep.subr.bf16.mxu0 %v2742
        %2781 = vmatpush2.bf16.xpose.msra.mxu0 %v2679
        %2782 = vmatprep.subr.bf16.mxu0 %v2739
        %2783 = vmatpush2.bf16.xpose.msra.mxu0 %v2677
        %2784 = vmatprep.subr.bf16.mxu0 %v2736
        %2785 = vmatpush2.bf16.xpose.msra.mxu0 %v2675
        %2786 = vmatprep.subr.bf16.mxu0 %v2733
        %2787 = vmatpush2.bf16.xpose.msra.mxu0 %v2673
        %2788 = vmatprep.mubr.bf16.mxu0 %v2706
        %2789 = vmatmul.mubr.bf16.gmra.mxu0 %v2558
        %v2790 = vpop.f32.mrf.mxu0
        %v2791 = vadd.f32 0.0, %v2790
        %v2792 = vpop.f32.mrf.mxu0
        %v2793 = vadd.f32 0.0, %v2792
        %v2794 = vpop.f32.mrf.mxu0
        %v2795 = vpop.f32.mrf.mxu0
        %2796 = vdwg.mxu0
        %v2797 = vld [vmem:[%s2] sm:$0xff]
        %2799 = vset.pattern.permute.xlu0 0
        %2800 = vperm.xlu0 %2799, %v2797
        %v2801 = vpop.permute.xlu0 %2800
        %v2803 = vmul.f32 %v2791, %v2801
        %v2804 = vmul.f32 %v2793, %v2801
        %v2805 = vld [vmem:[%s3] sm:$0xff]
        %2807 = vset.pattern.permute.xlu0 0
        %2808 = vperm.xlu0 %2807, %v2805
        %v2809 = vpop.permute.xlu0 %2808
        %v2811 = vadd.f32 %v2803, %v2809
        %v2812 = vadd.f32 %v2804, %v2809
        %v2813 = vmax.f32 %v2811, 0.0
        %v2814 = vmax.f32 %v2812, 0.0
        %2815 = vst [vmem:[%s215] sm:$0xff] %v2813
        %2816 = vst [vmem:[%s215 + $0x8] sm:$0xff] %v2814
        %s2817 = sand.u32 %s118, 1
        %s2818 = scalar_lea.sflag [#allocation6], %s2817
        %s2819 = sand.u32 %s118, 1
        %s2820 = smul.addr %s2819, 16
        %s2821 = scalar_lea.vmem [#allocation7], %s2820
        // Predicated region
        $region41: #{tpu_custom_call.1} parent=35 // pred_check
          %p2822 = pneg %p128
        $region42: #{tpu_custom_call.1} parent=35 // pred_check_branch
          %2824 = sbr.rel (%p2822) target = $region44
        $region43: #{tpu_custom_call.1} parent=35 // pred_region
          %s2826 = ssub.s32 256, 256
          %2827 = vsyncadd %s2818, %s2826
          %s2828 = smul.addr %s21, 2
          %s2829 = smul.addr %s2828, 128
          %s2830 = scalar_lea.hbm %s4, %s2829
          %s2832 = sshll.u32 %s2821, 4
          %s2833 = int_to_ptr.vmem [resolvable:$true] %s2832
          %2835 = dma.vmem_to_hbm [thread:$0]  %s2833, 256, %s2830, %s2818
        $region44: #{tpu_custom_call.1} parent=35 // pred_fallthru
          _
      $region36: #{tpu_custom_call.1} parent=5 // pred_fallthru
        _
      %p2836 = scmp.le.s32.totalorder 2, %s16
      // Predicated region
      $region45: #{tpu_custom_call.1} parent=5 // pred_check
        %p2837 = pneg %p2836
      $region46: #{tpu_custom_call.1} parent=5 // pred_check_branch
        %2839 = sbr.rel (%p2837) target = $region48
      $region47: #{tpu_custom_call.1} parent=5 // pred_region
        %s2840 = ssub.s32 %s16, 2
        // Predicated region
        $region49: #{tpu_custom_call.1} parent=47 // pred_check
          %p2841 = pneg %p134
        $region50: #{tpu_custom_call.1} parent=47 // pred_check_branch
          %2843 = sbr.rel (%p2841) target = $region52
        $region51: #{tpu_custom_call.1} parent=47 // pred_region
          %s2844 = sand.u32 %s119, 1
          %s2845 = scalar_lea.sflag [#allocation6], %s2844
          %s2846 = sand.u32 %s119, 1
          %s2847 = smul.addr %s2846, 16
          %s2848 = scalar_lea.vmem [#allocation7], %s2847
          %2849 = dma.done %s2845, 256
        $region52: #{tpu_custom_call.1} parent=47 // pred_fallthru
          _
      $region48: #{tpu_custom_call.1} parent=5 // pred_fallthru
        _
    $region6: #{tpu_custom_call.1} parent=1 // loop_footer
      %s20 = sadd.s32 1, %s16
    $region7: #{tpu_custom_call.1} parent=1 // loop_footer_branch
      %15 = sbr.rel target = $region3
    $region8: #{tpu_custom_call.1} parent=1 // loop_exit
      _
    %2850 = vsyncpa [#allocation5], 1
    %s2851 = scalar_lea.sflag [#allocation5], 1
    %2852 = vsyncpa %s2851, 1
    %2853 = vsyncpa [#allocation6], 1
    %s2854 = scalar_lea.sflag [#allocation6], 1
    %2855 = vsyncpa %s2854, 1

</llo_original>
